<compile_context>
chip_gen: v7x
topology: tpu7x:2x2x1
jax: 0.10.0
libtpu: 0.0.40
codegen_flags: <defaults>
</compile_context>

<pallas_src>
import jax
import jax.numpy as jnp
from jax.experimental import pallas as pl
from jax.experimental.pallas import tpu as pltpu


def _round_up(x, m):
    return (x + m - 1) // m * m


def _pick_batch_block(n, s_out):
    """Images per grid step: keep >=2 grid steps (v7x megacore) and grow the
    folded lane extent toward >=512."""
    if n <= 2:
        return 1
    best = 1
    for b in range(1, n // 2 + 1):
        if n % b == 0:
            best = b
            if b * s_out >= 512:
                break
    return best


# ---------------------------------------------------------------------------
# Pallas kernel
# ---------------------------------------------------------------------------

def _make_kernel(*, B, H, W, kh, kw, wp, ph_lo, pw_lo, neg1,
                 s_out, s_h, s_x, cin, cout, identity_residual):
    """Fused ResNetBlock kernel for B images (batch folded into the lane axis).

    Flat-halo convolution: each image is zero-padded spatially, flattened and
    flat-padded with a halo so every kxk tap is a contiguous shifted slice of
    the lane axis.  The shifts are done ONCE per conv into a stacked RHS, which
    feeds a single MXU dot per conv.
    """
    khw = kh * kw

    def kernel(x_ref, w1_ref, sc1_ref, sh1_ref, w2_ref, sc2_ref, sh2_ref,
               mask_ref, *rest):
        if identity_residual:
            o_ref, xbuf, rhs1, hbuf, rhs2 = rest
        else:
            bres_ref, o_ref, xbuf, rhs1, hbuf, rhs2 = rest

        # ---- 1. in-kernel halo: zero-padded, flattened, bf16 image buffer ----
        xbuf[...] = jnp.zeros_like(xbuf)
        for b in range(B):
            xb = x_ref[b].astype(jnp.bfloat16)            # (Cin, H*W)
            base = b * s_x + 2 * neg1
            for i in range(H):
                off = base + (ph_lo + i) * wp + pw_lo
                xbuf[:, off:off + W] = xb[:, i * W:(i + 1) * W]

        # ---- 2. conv1: stack kh*kw shifted slices once, single MXU dot -------
        for b in range(B):
            for t in range(khw):
                di, dj = divmod(t, kw)
                src = b * s_x + di * wp + dj
                rhs1[t * cin:(t + 1) * cin, b * s_h:(b + 1) * s_h] = \
                    xbuf[:, src:src + s_h]
        acc1 = jnp.dot(w1_ref[...], rhs1[...], preferred_element_type=jnp.float32)
        # BN scale/shift post-accumulation in f32 (weights stay raw bf16); the
        # mask zeroes the padding ring + halo so conv2 sees true zero padding.
        h = jnp.maximum(acc1 * sc1_ref[...] + sh1_ref[...], 0.0) * mask_ref[...]
        hbuf[...] = h.astype(jnp.bfloat16)

        # ---- 3. conv2 (+ folded 1x1 residual): stacked slices of h, one dot ---
        for b in range(B):
            ob = b * s_out
            for t in range(khw):
                di, dj = divmod(t, kw)
                src = b * s_h + di * wp + dj
                rhs2[t * cout:(t + 1) * cout, ob:ob + s_out] = \
                    hbuf[:, src:src + s_out]
            if not identity_residual:
                xc = b * s_x + 2 * neg1
                rhs2[khw * cout:khw * cout + cin, ob:ob + s_out] = \
                    xbuf[:, xc:xc + s_out]
        acc2 = jnp.dot(w2_ref[...], rhs2[...], preferred_element_type=jnp.float32)
        y = jnp.maximum(acc2[:cout] * sc2_ref[...] + sh2_ref[...], 0.0)

        # ---- 4. residual add + lane-dense (128-multiple) per-image store ------
        if identity_residual:
            for b in range(B):
                xc = b * s_x + 2 * neg1
                res = xbuf[:, xc:xc + s_out].astype(jnp.float32)
                o_ref[b] = y[:, b * s_out:(b + 1) * s_out] + res
        else:
            out = y + (acc2[cout:] + bres_ref[...])
            for b in range(B):
                o_ref[b] = out[:, b * s_out:(b + 1) * s_out]

    return kernel


# ---------------------------------------------------------------------------
# Wrapper (layout plumbing: folding, weight reshapes, lane-padded segments)
# ---------------------------------------------------------------------------

def resnet_block_forward(x_nchw, params, eps=1e-5):
    """ResNetBlock.forward (eval mode, attention disabled). NCHW in -> NCHW out."""
    n, cin, h, w = x_nchw.shape
    cout, _, kh, kw = params["w1"].shape
    khw = kh * kw
    ph_lo, pw_lo = (kh - 1) // 2, (kw - 1) // 2
    hp, wp = h + kh - 1, w + kw - 1
    p_grid = hp * wp                       # padded-grid pixels per image
    neg1 = ph_lo * wp + pw_lo              # most negative flat tap offset
    s_max = (kh - 1) * wp + (kw - 1)       # largest flat tap shift

    # Lane-dense (128-multiple) per-image segment widths for out / h / x buffers.
    s_out = _round_up(p_grid, 128)
    s_h = _round_up(s_out + s_max, 128)
    s_x = _round_up(s_h + s_max, 128)

    identity_residual = params.get("w_res") is None
    if identity_residual and cin != cout:
        raise ValueError("identity residual requires in_dim == out_dim")

    # Fold B images into the lane axis per grid step; keep >=2 parallel steps.
    bsz = _pick_batch_block(n, s_out)
    grid = (n // bsz,)

    # --- weights: raw bf16, tap-major im2col order; BN applied post-acc in f32 ---
    def taps(wconv):  # (Cout, Cin, kh, kw) -> (Cout, kh*kw*Cin)
        co, ci = wconv.shape[0], wconv.shape[1]
        return jnp.transpose(wconv, (0, 2, 3, 1)).reshape(co, khw * ci)

    def bn_fold(bias, g, beta, m, v):
        scale = g / jnp.sqrt(v + eps)
        shift = (bias - m) * scale + beta
        return (scale.reshape(-1, 1).astype(jnp.float32),
                shift.reshape(-1, 1).astype(jnp.float32))

    w1f = taps(params["w1"]).astype(jnp.bfloat16)
    sc1, sh1 = bn_fold(params["b1"], params["g1"], params["beta1"],
                       params["m1"], params["v1"])
    sc2, sh2 = bn_fold(params["b2"], params["g2"], params["beta2"],
                       params["m2"], params["v2"])

    w2_taps = taps(params["w2"])
    if identity_residual:
        w2f = w2_taps.astype(jnp.bfloat16)                    # (Cout, khw*Cout)
    else:
        # Fold the 1x1 residual conv into conv2's matmul: extra output rows /
        # contraction columns with a block structure so ReLU only hits conv2.
        k2 = khw * cout + cin
        w2f = jnp.zeros((2 * cout, k2), jnp.float32)
        w2f = w2f.at[:cout, :khw * cout].set(w2_taps)
        w2f = w2f.at[cout:, khw * cout:].set(params["w_res"].reshape(cout, cin))
        w2f = w2f.astype(jnp.bfloat16)
    m2, k2 = w2f.shape

    # Validity mask over one image's h segment: 1 at real output pixels, 0 on the
    # zero-padding ring and the flat halo (tiled across the folded batch).
    q = jnp.arange(s_h)
    p = q - neg1
    row, col = p // wp, p % wp
    valid = ((p >= 0) & (p < p_grid)
             & (row >= ph_lo) & (row < ph_lo + h)
             & (col >= pw_lo) & (col < pw_lo + w))
    mask = jnp.tile(valid.astype(jnp.float32), (bsz,)).reshape(1, bsz * s_h)

    # Free reshape only -- the zero-pad + bf16 cast happen inside the kernel, so
    # no extra full copy of the input is materialized in HBM.
    x2d = x_nchw.reshape(n, cin, h * w)

    inputs = [x2d, w1f, sc1, sh1, w2f, sc2, sh2, mask]
    in_specs = [
        pl.BlockSpec((bsz, cin, h * w), lambda g: (g, 0, 0)),   # x (B images)
        pl.BlockSpec((cout, khw * cin), lambda g: (0, 0)),      # conv1 weights
        pl.BlockSpec((cout, 1), lambda g: (0, 0)),              # conv1 BN scale
        pl.BlockSpec((cout, 1), lambda g: (0, 0)),              # conv1 BN shift
        pl.BlockSpec((m2, k2), lambda g: (0, 0)),               # conv2 (+res) weights
        pl.BlockSpec((cout, 1), lambda g: (0, 0)),              # conv2 BN scale
        pl.BlockSpec((cout, 1), lambda g: (0, 0)),              # conv2 BN shift
        pl.BlockSpec((1, bsz * s_h), lambda g: (0, 0)),         # validity mask
    ]
    if not identity_residual:
        inputs.append(params["b_res"].reshape(cout, 1).astype(jnp.float32))
        in_specs.append(pl.BlockSpec((cout, 1), lambda g: (0, 0)))

    kernel = _make_kernel(B=bsz, H=h, W=w, kh=kh, kw=kw, wp=wp, ph_lo=ph_lo,
                          pw_lo=pw_lo, neg1=neg1, s_out=s_out, s_h=s_h, s_x=s_x,
                          cin=cin, cout=cout, identity_residual=identity_residual)

    out_flat = pl.pallas_call(
        kernel,
        out_shape=jax.ShapeDtypeStruct((n, cout, s_out), jnp.float32),
        grid=grid,
        in_specs=in_specs,
        out_specs=pl.BlockSpec((bsz, cout, s_out), lambda g: (g, 0, 0)),
        scratch_shapes=[
            pltpu.VMEM((cin, bsz * s_x), jnp.bfloat16),         # halo'd flat x
            pltpu.VMEM((khw * cin, bsz * s_h), jnp.bfloat16),   # conv1 stacked RHS
            pltpu.VMEM((cout, bsz * s_h), jnp.bfloat16),        # masked h (VMEM only)
            pltpu.VMEM((k2, bsz * s_out), jnp.bfloat16),        # conv2(+res) stacked RHS
        ],
        compiler_params=pltpu.CompilerParams(
            dimension_semantics=("parallel",),
            vmem_limit_bytes=32 * 1024 * 1024),
    )(*inputs)

    # Strip the lane padding + padding ring; stays NCHW end-to-end.
    out = out_flat[:, :, :p_grid].reshape(n, cout, hp, wp)
    return out[:, :, ph_lo:ph_lo + h, pw_lo:pw_lo + w]


# ---------------------------------------------------------------------------
# Pure-JAX references (correctness checks)
# ---------------------------------------------------------------------------

def _conv_same(x, w_oihw):
    return jax.lax.conv_general_dilated(
        x, w_oihw, (1, 1), "SAME", dimension_numbers=("NCHW", "OIHW", "NCHW"))


def _ref_forward(x, p, eps=1e-5):
    """Exact f32 reference of the module's forward (eval mode)."""
    def conv(xx, w, b):
        return _conv_same(xx, w) + b[None, :, None, None]

    def bn(xx, g, be, m, v):
        s = g / jnp.sqrt(v + eps)
        return (xx - m[None, :, None, None]) * s[None, :, None, None] + be[None, :, None, None]

    h = jax.nn.relu(bn(conv(x, p["w1"], p["b1"]), p["g1"], p["beta1"], p["m1"], p["v1"]))
    y = jax.nn.relu(bn(conv(h, p["w2"], p["b2"]), p["g2"], p["beta2"], p["m2"], p["v2"]))
    res = x if p.get("w_res") is None else conv(x, p["w_res"], p["b_res"])
    return y + res


def _ref_forward_q(x, p, eps=1e-5):
    """bf16-quantized reference that mirrors the kernel numerics (bf16 operands,
    f32 accumulation, bf16 intermediate h, post-accumulation BN) -> tight check."""
    f32 = jnp.float32

    def q(a):
        return a.astype(jnp.bfloat16).astype(f32)

    def scale_shift(b, g, be, m, v):
        s = g / jnp.sqrt(v + eps)
        return s[None, :, None, None], ((b - m) * s + be)[None, :, None, None]

    s1, t1 = scale_shift(p["b1"], p["g1"], p["beta1"], p["m1"], p["v1"])
    s2, t2 = scale_shift(p["b2"], p["g2"], p["beta2"], p["m2"], p["v2"])
    hq = q(jax.nn.relu(_conv_same(q(x), q(p["w1"])) * s1 + t1))
    y = jax.nn.relu(_conv_same(hq, q(p["w2"])) * s2 + t2)
    if p.get("w_res") is None:
        res = q(x)
    else:
        res = _conv_same(q(x), q(p["w_res"])) + p["b_res"][None, :, None, None]
    return y + res


# ---------------------------------------------------------------------------
# Main
# ---------------------------------------------------------------------------

if __name__ == "__main__":
    def make_params(key, cin, cout, kh, kw, with_res):
        ks = jax.random.split(key, 16)
        p = {
            "w1": 0.1 * jax.random.normal(ks[0], (cout, cin, kh, kw), jnp.float32),
            "b1": 0.05 * jax.random.normal(ks[1], (cout,), jnp.float32),
            "g1": 1.0 + 0.1 * jax.random.normal(ks[2], (cout,), jnp.float32),
            "beta1": 0.1 * jax.random.normal(ks[3], (cout,), jnp.float32),
            "m1": 0.1 * jax.random.normal(ks[4], (cout,), jnp.float32),
            "v1": 0.5 + jnp.abs(jax.random.normal(ks[5], (cout,), jnp.float32)),
            "w2": 0.1 * jax.random.normal(ks[6], (cout, cout, kh, kw), jnp.float32),
            "b2": 0.05 * jax.random.normal(ks[7], (cout,), jnp.float32),
            "g2": 1.0 + 0.1 * jax.random.normal(ks[8], (cout,), jnp.float32),
            "beta2": 0.1 * jax.random.normal(ks[9], (cout,), jnp.float32),
            "m2": 0.1 * jax.random.normal(ks[10], (cout,), jnp.float32),
            "v2": 0.5 + jnp.abs(jax.random.normal(ks[11], (cout,), jnp.float32)),
        }
        if with_res:
            p["w_res"] = 0.1 * jax.random.normal(ks[12], (cout, cin, 1, 1), jnp.float32)
            p["b_res"] = 0.05 * jax.random.normal(ks[13], (cout,), jnp.float32)
        else:
            p["w_res"] = None
            p["b_res"] = None
        return p

    def check(name, x, p):
        out = jax.block_until_ready(resnet_block_forward(x, p))
        ref = _ref_forward(x, p)
        refq = _ref_forward_q(x, p)
        assert out.shape == ref.shape, (name, out.shape, ref.shape)
        # Loose check vs exact f32 reference (bf16 operands in the kernel).
        assert jnp.allclose(out, ref, rtol=5e-2, atol=5e-2), \
            (name, float(jnp.max(jnp.abs(out - ref))))
        # Tight check vs bf16-quantized reference (same numerics as the kernel).
        assert jnp.allclose(out, refq, rtol=2e-3, atol=2e-3), \
            (name, float(jnp.max(jnp.abs(out - refq))))

    key = jax.random.PRNGKey(0)
    k1, k2, k3, k4, k5, k6 = jax.random.split(key, 6)

    # Case 1: in_dim != out_dim -> 1x1 residual conv folded into conv2's matmul.
    p1 = make_params(k1, 4, 8, 3, 3, with_res=True)
    x1 = jax.random.normal(k2, (2, 4, 16, 16), jnp.float32)
    check("res_conv_16x16", x1, p1)

    # Case 2: in_dim == out_dim -> identity residual (direct add).
    p2 = make_params(k3, 8, 8, 3, 3, with_res=False)
    x2 = jax.random.normal(k4, (2, 8, 16, 16), jnp.float32)
    check("identity_16x16", x2, p2)

    # Case 3: non-square spatial + batch folding (N=4 -> 2 images per grid step).
    p3 = make_params(k5, 4, 8, 3, 3, with_res=True)
    x3 = jax.random.normal(k6, (4, 4, 8, 12), jnp.float32)
    check("res_conv_8x12_batched", x3, p3)

    print("KERNEL_OK")
</pallas_src>

<mosaic_0001>
module attributes {stable_mosaic.version = 11 : i64} {
  func.func @kernel(%arg0: i32, %arg1: memref<1x4x256xf32, #tpu.memory_space<vmem>>, %arg2: memref<8x36xbf16, #tpu.memory_space<vmem>>, %arg3: memref<8x1xf32, #tpu.memory_space<vmem>>, %arg4: memref<8x1xf32, #tpu.memory_space<vmem>>, %arg5: memref<16x76xbf16, #tpu.memory_space<vmem>>, %arg6: memref<8x1xf32, #tpu.memory_space<vmem>>, %arg7: memref<8x1xf32, #tpu.memory_space<vmem>>, %arg8: memref<1x512xf32, #tpu.memory_space<vmem>>, %arg9: memref<8x1xf32, #tpu.memory_space<vmem>>, %arg10: memref<1x8x384xf32, #tpu.memory_space<vmem>>, %arg11: memref<4x640xbf16, #tpu.memory_space<vmem>>, %arg12: memref<36x512xbf16, #tpu.memory_space<vmem>>, %arg13: memref<8x512xbf16, #tpu.memory_space<vmem>>, %arg14: memref<76x384xbf16, #tpu.memory_space<vmem>>) attributes {dimension_semantics = [#tpu.dimension_semantics<parallel>], iteration_bounds = array<i64: 2>, scalar_prefetch = 0 : i64, scratch_operands = 4 : i64, tpu.core_type = #tpu.core_type<tc>, window_params = [{transform_indices = @transform_0, window_bounds = array<i64: 1, 4, 256>}, {pipeline_mode = #tpu.pipeline_mode<synchronous>, transform_indices = @transform_1, window_bounds = array<i64: 8, 36>}, {pipeline_mode = #tpu.pipeline_mode<synchronous>, transform_indices = @transform_2, window_bounds = array<i64: 8, 1>}, {pipeline_mode = #tpu.pipeline_mode<synchronous>, transform_indices = @transform_3, window_bounds = array<i64: 8, 1>}, {pipeline_mode = #tpu.pipeline_mode<synchronous>, transform_indices = @transform_4, window_bounds = array<i64: 16, 76>}, {pipeline_mode = #tpu.pipeline_mode<synchronous>, transform_indices = @transform_5, window_bounds = array<i64: 8, 1>}, {pipeline_mode = #tpu.pipeline_mode<synchronous>, transform_indices = @transform_6, window_bounds = array<i64: 8, 1>}, {pipeline_mode = #tpu.pipeline_mode<synchronous>, transform_indices = @transform_7, window_bounds = array<i64: 1, 512>}, {pipeline_mode = #tpu.pipeline_mode<synchronous>, transform_indices = @transform_8, window_bounds = array<i64: 8, 1>}, {transform_indices = @transform_9, window_bounds = array<i64: 1, 8, 384>}]} {
    %cst = arith.constant 0.000000e+00 : bf16
    %0 = vector.broadcast %cst : bf16 to vector<4x640xbf16>
    %c0 = arith.constant 0 : index
    %c0_0 = arith.constant 0 : index
    %1 = vector.load %arg11[%c0, %c0_0] : memref<4x640xbf16, #tpu.memory_space<vmem>>, vector<4x640xbf16>
    tpu.vector_store %arg11[%c0, %c0_0], %0 {strides = array<i32>} : memref<4x640xbf16, #tpu.memory_space<vmem>>, vector<4x640xbf16>,
    %c0_1 = arith.constant 0 : index
    %c0_2 = arith.constant 0 : index
    %c0_3 = arith.constant 0 : index
    %2 = vector.load %arg1[%c0_1, %c0_2, %c0_3] : memref<1x4x256xf32, #tpu.memory_space<vmem>>, vector<1x4x256xf32>
    %3 = vector.shape_cast %2 : vector<1x4x256xf32> to vector<4x256xf32>
    %4 = arith.truncf %3 : vector<4x256xf32> to vector<4x256xbf16>
    %5 = vector.extract_strided_slice %4 {offsets = [0, 0], sizes = [4, 16], strides = [1, 1]} : vector<4x256xbf16> to vector<4x16xbf16>
    %c0_4 = arith.constant 0 : index
    %c57 = arith.constant 57 : index
    %6 = vector.load %arg11[%c0_4, %c57] : memref<4x640xbf16, #tpu.memory_space<vmem>>, vector<4x16xbf16>
    tpu.vector_store %arg11[%c0_4, %c57], %5 {strides = array<i32>} : memref<4x640xbf16, #tpu.memory_space<vmem>>, vector<4x16xbf16>,
    %7 = vector.extract_strided_slice %4 {offsets = [0, 16], sizes = [4, 16], strides = [1, 1]} : vector<4x256xbf16> to vector<4x16xbf16>
    %c0_5 = arith.constant 0 : index
    %c75 = arith.constant 75 : index
    %8 = vector.load %arg11[%c0_5, %c75] : memref<4x640xbf16, #tpu.memory_space<vmem>>, vector<4x16xbf16>
    tpu.vector_store %arg11[%c0_5, %c75], %7 {strides = array<i32>} : memref<4x640xbf16, #tpu.memory_space<vmem>>, vector<4x16xbf16>,
    %9 = vector.extract_strided_slice %4 {offsets = [0, 32], sizes = [4, 16], strides = [1, 1]} : vector<4x256xbf16> to vector<4x16xbf16>
    %c0_6 = arith.constant 0 : index
    %c93 = arith.constant 93 : index
    %10 = vector.load %arg11[%c0_6, %c93] : memref<4x640xbf16, #tpu.memory_space<vmem>>, vector<4x16xbf16>
    tpu.vector_store %arg11[%c0_6, %c93], %9 {strides = array<i32>} : memref<4x640xbf16, #tpu.memory_space<vmem>>, vector<4x16xbf16>,
    %11 = vector.extract_strided_slice %4 {offsets = [0, 48], sizes = [4, 16], strides = [1, 1]} : vector<4x256xbf16> to vector<4x16xbf16>
    %c0_7 = arith.constant 0 : index
    %c111 = arith.constant 111 : index
    %12 = vector.load %arg11[%c0_7, %c111] : memref<4x640xbf16, #tpu.memory_space<vmem>>, vector<4x16xbf16>
    tpu.vector_store %arg11[%c0_7, %c111], %11 {strides = array<i32>} : memref<4x640xbf16, #tpu.memory_space<vmem>>, vector<4x16xbf16>,
    %13 = vector.extract_strided_slice %4 {offsets = [0, 64], sizes = [4, 16], strides = [1, 1]} : vector<4x256xbf16> to vector<4x16xbf16>
    %c0_8 = arith.constant 0 : index
    %c129 = arith.constant 129 : index
    %14 = vector.load %arg11[%c0_8, %c129] : memref<4x640xbf16, #tpu.memory_space<vmem>>, vector<4x16xbf16>
    tpu.vector_store %arg11[%c0_8, %c129], %13 {strides = array<i32>} : memref<4x640xbf16, #tpu.memory_space<vmem>>, vector<4x16xbf16>,
    %15 = vector.extract_strided_slice %4 {offsets = [0, 80], sizes = [4, 16], strides = [1, 1]} : vector<4x256xbf16> to vector<4x16xbf16>
    %c0_9 = arith.constant 0 : index
    %c147 = arith.constant 147 : index
    %16 = vector.load %arg11[%c0_9, %c147] : memref<4x640xbf16, #tpu.memory_space<vmem>>, vector<4x16xbf16>
    tpu.vector_store %arg11[%c0_9, %c147], %15 {strides = array<i32>} : memref<4x640xbf16, #tpu.memory_space<vmem>>, vector<4x16xbf16>,
    %17 = vector.extract_strided_slice %4 {offsets = [0, 96], sizes = [4, 16], strides = [1, 1]} : vector<4x256xbf16> to vector<4x16xbf16>
    %c0_10 = arith.constant 0 : index
    %c165 = arith.constant 165 : index
    %18 = vector.load %arg11[%c0_10, %c165] : memref<4x640xbf16, #tpu.memory_space<vmem>>, vector<4x16xbf16>
    tpu.vector_store %arg11[%c0_10, %c165], %17 {strides = array<i32>} : memref<4x640xbf16, #tpu.memory_space<vmem>>, vector<4x16xbf16>,
    %19 = vector.extract_strided_slice %4 {offsets = [0, 112], sizes = [4, 16], strides = [1, 1]} : vector<4x256xbf16> to vector<4x16xbf16>
    %c0_11 = arith.constant 0 : index
    %c183 = arith.constant 183 : index
    %20 = vector.load %arg11[%c0_11, %c183] : memref<4x640xbf16, #tpu.memory_space<vmem>>, vector<4x16xbf16>
    tpu.vector_store %arg11[%c0_11, %c183], %19 {strides = array<i32>} : memref<4x640xbf16, #tpu.memory_space<vmem>>, vector<4x16xbf16>,
    %21 = vector.extract_strided_slice %4 {offsets = [0, 128], sizes = [4, 16], strides = [1, 1]} : vector<4x256xbf16> to vector<4x16xbf16>
    %c0_12 = arith.constant 0 : index
    %c201 = arith.constant 201 : index
    %22 = vector.load %arg11[%c0_12, %c201] : memref<4x640xbf16, #tpu.memory_space<vmem>>, vector<4x16xbf16>
    tpu.vector_store %arg11[%c0_12, %c201], %21 {strides = array<i32>} : memref<4x640xbf16, #tpu.memory_space<vmem>>, vector<4x16xbf16>,
    %23 = vector.extract_strided_slice %4 {offsets = [0, 144], sizes = [4, 16], strides = [1, 1]} : vector<4x256xbf16> to vector<4x16xbf16>
    %c0_13 = arith.constant 0 : index
    %c219 = arith.constant 219 : index
    %24 = vector.load %arg11[%c0_13, %c219] : memref<4x640xbf16, #tpu.memory_space<vmem>>, vector<4x16xbf16>
    tpu.vector_store %arg11[%c0_13, %c219], %23 {strides = array<i32>} : memref<4x640xbf16, #tpu.memory_space<vmem>>, vector<4x16xbf16>,
    %25 = vector.extract_strided_slice %4 {offsets = [0, 160], sizes = [4, 16], strides = [1, 1]} : vector<4x256xbf16> to vector<4x16xbf16>
    %c0_14 = arith.constant 0 : index
    %c237 = arith.constant 237 : index
    %26 = vector.load %arg11[%c0_14, %c237] : memref<4x640xbf16, #tpu.memory_space<vmem>>, vector<4x16xbf16>
    tpu.vector_store %arg11[%c0_14, %c237], %25 {strides = array<i32>} : memref<4x640xbf16, #tpu.memory_space<vmem>>, vector<4x16xbf16>,
    %27 = vector.extract_strided_slice %4 {offsets = [0, 176], sizes = [4, 16], strides = [1, 1]} : vector<4x256xbf16> to vector<4x16xbf16>
    %c0_15 = arith.constant 0 : index
    %c255 = arith.constant 255 : index
    %28 = vector.load %arg11[%c0_15, %c255] : memref<4x640xbf16, #tpu.memory_space<vmem>>, vector<4x16xbf16>
    tpu.vector_store %arg11[%c0_15, %c255], %27 {strides = array<i32>} : memref<4x640xbf16, #tpu.memory_space<vmem>>, vector<4x16xbf16>,
    %29 = vector.extract_strided_slice %4 {offsets = [0, 192], sizes = [4, 16], strides = [1, 1]} : vector<4x256xbf16> to vector<4x16xbf16>
    %c0_16 = arith.constant 0 : index
    %c273 = arith.constant 273 : index
    %30 = vector.load %arg11[%c0_16, %c273] : memref<4x640xbf16, #tpu.memory_space<vmem>>, vector<4x16xbf16>
    tpu.vector_store %arg11[%c0_16, %c273], %29 {strides = array<i32>} : memref<4x640xbf16, #tpu.memory_space<vmem>>, vector<4x16xbf16>,
    %31 = vector.extract_strided_slice %4 {offsets = [0, 208], sizes = [4, 16], strides = [1, 1]} : vector<4x256xbf16> to vector<4x16xbf16>
    %c0_17 = arith.constant 0 : index
    %c291 = arith.constant 291 : index
    %32 = vector.load %arg11[%c0_17, %c291] : memref<4x640xbf16, #tpu.memory_space<vmem>>, vector<4x16xbf16>
    tpu.vector_store %arg11[%c0_17, %c291], %31 {strides = array<i32>} : memref<4x640xbf16, #tpu.memory_space<vmem>>, vector<4x16xbf16>,
    %33 = vector.extract_strided_slice %4 {offsets = [0, 224], sizes = [4, 16], strides = [1, 1]} : vector<4x256xbf16> to vector<4x16xbf16>
    %c0_18 = arith.constant 0 : index
    %c309 = arith.constant 309 : index
    %34 = vector.load %arg11[%c0_18, %c309] : memref<4x640xbf16, #tpu.memory_space<vmem>>, vector<4x16xbf16>
    tpu.vector_store %arg11[%c0_18, %c309], %33 {strides = array<i32>} : memref<4x640xbf16, #tpu.memory_space<vmem>>, vector<4x16xbf16>,
    %35 = vector.extract_strided_slice %4 {offsets = [0, 240], sizes = [4, 16], strides = [1, 1]} : vector<4x256xbf16> to vector<4x16xbf16>
    %c0_19 = arith.constant 0 : index
    %c327 = arith.constant 327 : index
    %36 = vector.load %arg11[%c0_19, %c327] : memref<4x640xbf16, #tpu.memory_space<vmem>>, vector<4x16xbf16>
    tpu.vector_store %arg11[%c0_19, %c327], %35 {strides = array<i32>} : memref<4x640xbf16, #tpu.memory_space<vmem>>, vector<4x16xbf16>,
    %c0_20 = arith.constant 0 : index
    %c0_21 = arith.constant 0 : index
    %37 = vector.load %arg11[%c0_20, %c0_21] : memref<4x640xbf16, #tpu.memory_space<vmem>>, vector<4x512xbf16>
    %c0_22 = arith.constant 0 : index
    %c0_23 = arith.constant 0 : index
    %38 = vector.load %arg12[%c0_22, %c0_23] : memref<36x512xbf16, #tpu.memory_space<vmem>>, vector<4x512xbf16>
    tpu.vector_store %arg12[%c0_22, %c0_23], %37 {strides = array<i32>} : memref<36x512xbf16, #tpu.memory_space<vmem>>, vector<4x512xbf16>,
    %c0_24 = arith.constant 0 : index
    %c1 = arith.constant 1 : index
    %39 = vector.load %arg11[%c0_24, %c1] : memref<4x640xbf16, #tpu.memory_space<vmem>>, vector<4x512xbf16>
    %c4 = arith.constant 4 : index
    %c0_25 = arith.constant 0 : index
    %40 = vector.load %arg12[%c4, %c0_25] : memref<36x512xbf16, #tpu.memory_space<vmem>>, vector<4x512xbf16>
    tpu.vector_store %arg12[%c4, %c0_25], %39 {strides = array<i32>} : memref<36x512xbf16, #tpu.memory_space<vmem>>, vector<4x512xbf16>,
    %c0_26 = arith.constant 0 : index
    %c2 = arith.constant 2 : index
    %41 = vector.load %arg11[%c0_26, %c2] : memref<4x640xbf16, #tpu.memory_space<vmem>>, vector<4x512xbf16>
    %c8 = arith.constant 8 : index
    %c0_27 = arith.constant 0 : index
    %42 = vector.load %arg12[%c8, %c0_27] : memref<36x512xbf16, #tpu.memory_space<vmem>>, vector<4x512xbf16>
    tpu.vector_store %arg12[%c8, %c0_27], %41 {strides = array<i32>} : memref<36x512xbf16, #tpu.memory_space<vmem>>, vector<4x512xbf16>,
    %c0_28 = arith.constant 0 : index
    %c18 = arith.constant 18 : index
    %43 = vector.load %arg11[%c0_28, %c18] : memref<4x640xbf16, #tpu.memory_space<vmem>>, vector<4x512xbf16>
    %c12 = arith.constant 12 : index
    %c0_29 = arith.constant 0 : index
    %44 = vector.load %arg12[%c12, %c0_29] : memref<36x512xbf16, #tpu.memory_space<vmem>>, vector<4x512xbf16>
    tpu.vector_store %arg12[%c12, %c0_29], %43 {strides = array<i32>} : memref<36x512xbf16, #tpu.memory_space<vmem>>, vector<4x512xbf16>,
    %c0_30 = arith.constant 0 : index
    %c19 = arith.constant 19 : index
    %45 = vector.load %arg11[%c0_30, %c19] : memref<4x640xbf16, #tpu.memory_space<vmem>>, vector<4x512xbf16>
    %c16 = arith.constant 16 : index
    %c0_31 = arith.constant 0 : index
    %46 = vector.load %arg12[%c16, %c0_31] : memref<36x512xbf16, #tpu.memory_space<vmem>>, vector<4x512xbf16>
    tpu.vector_store %arg12[%c16, %c0_31], %45 {strides = array<i32>} : memref<36x512xbf16, #tpu.memory_space<vmem>>, vector<4x512xbf16>,
    %c0_32 = arith.constant 0 : index
    %c20 = arith.constant 20 : index
    %47 = vector.load %arg11[%c0_32, %c20] : memref<4x640xbf16, #tpu.memory_space<vmem>>, vector<4x512xbf16>
    %c20_33 = arith.constant 20 : index
    %c0_34 = arith.constant 0 : index
    %48 = vector.load %arg12[%c20_33, %c0_34] : memref<36x512xbf16, #tpu.memory_space<vmem>>, vector<4x512xbf16>
    tpu.vector_store %arg12[%c20_33, %c0_34], %47 {strides = array<i32>} : memref<36x512xbf16, #tpu.memory_space<vmem>>, vector<4x512xbf16>,
    %c0_35 = arith.constant 0 : index
    %c36 = arith.constant 36 : index
    %49 = vector.load %arg11[%c0_35, %c36] : memref<4x640xbf16, #tpu.memory_space<vmem>>, vector<4x512xbf16>
    %c24 = arith.constant 24 : index
    %c0_36 = arith.constant 0 : index
    %50 = vector.load %arg12[%c24, %c0_36] : memref<36x512xbf16, #tpu.memory_space<vmem>>, vector<4x512xbf16>
    tpu.vector_store %arg12[%c24, %c0_36], %49 {strides = array<i32>} : memref<36x512xbf16, #tpu.memory_space<vmem>>, vector<4x512xbf16>,
    %c0_37 = arith.constant 0 : index
    %c37 = arith.constant 37 : index
    %51 = vector.load %arg11[%c0_37, %c37] : memref<4x640xbf16, #tpu.memory_space<vmem>>, vector<4x512xbf16>
    %c28 = arith.constant 28 : index
    %c0_38 = arith.constant 0 : index
    %52 = vector.load %arg12[%c28, %c0_38] : memref<36x512xbf16, #tpu.memory_space<vmem>>, vector<4x512xbf16>
    tpu.vector_store %arg12[%c28, %c0_38], %51 {strides = array<i32>} : memref<36x512xbf16, #tpu.memory_space<vmem>>, vector<4x512xbf16>,
    %c0_39 = arith.constant 0 : index
    %c38 = arith.constant 38 : index
    %53 = vector.load %arg11[%c0_39, %c38] : memref<4x640xbf16, #tpu.memory_space<vmem>>, vector<4x512xbf16>
    %c32 = arith.constant 32 : index
    %c0_40 = arith.constant 0 : index
    %54 = vector.load %arg12[%c32, %c0_40] : memref<36x512xbf16, #tpu.memory_space<vmem>>, vector<4x512xbf16>
    tpu.vector_store %arg12[%c32, %c0_40], %53 {strides = array<i32>} : memref<36x512xbf16, #tpu.memory_space<vmem>>, vector<4x512xbf16>,
    %c0_41 = arith.constant 0 : index
    %c0_42 = arith.constant 0 : index
    %55 = vector.load %arg2[%c0_41, %c0_42] : memref<8x36xbf16, #tpu.memory_space<vmem>>, vector<8x36xbf16>
    %c0_43 = arith.constant 0 : index
    %c0_44 = arith.constant 0 : index
    %56 = vector.load %arg12[%c0_43, %c0_44] : memref<36x512xbf16, #tpu.memory_space<vmem>>, vector<36x512xbf16>
    %cst_45 = arith.constant dense<0.000000e+00> : vector<8x512xf32>
    %57 = tpu.matmul %55, %56, %cst_45 {dimension_numbers = #tpu.dot_dimension_numbers<[1], [0], [0], [1], [0, 0, 1, 1], [], []>} : vector<8x36xbf16>, vector<36x512xbf16>, vector<8x512xf32> -> vector<8x512xf32>
    %c0_46 = arith.constant 0 : index
    %c0_47 = arith.constant 0 : index
    %58 = vector.load %arg3[%c0_46, %c0_47] : memref<8x1xf32, #tpu.memory_space<vmem>>, vector<8x1xf32>
    %59 = vector.broadcast %58 : vector<8x1xf32> to vector<8x512xf32>
    %60 = arith.mulf %57, %59 : vector<8x512xf32>
    %c0_48 = arith.constant 0 : index
    %c0_49 = arith.constant 0 : index
    %61 = vector.load %arg4[%c0_48, %c0_49] : memref<8x1xf32, #tpu.memory_space<vmem>>, vector<8x1xf32>
    %62 = vector.broadcast %61 : vector<8x1xf32> to vector<8x512xf32>
    %63 = arith.addf %60, %62 : vector<8x512xf32>
    %cst_50 = arith.constant 0.000000e+00 : f32
    %64 = vector.broadcast %cst_50 : f32 to vector<8x512xf32>
    %65 = arith.maximumf %63, %64 : vector<8x512xf32>
    %c0_51 = arith.constant 0 : index
    %c0_52 = arith.constant 0 : index
    %66 = vector.load %arg8[%c0_51, %c0_52] : memref<1x512xf32, #tpu.memory_space<vmem>>, vector<1x512xf32>
    %67 = vector.broadcast %66 : vector<1x512xf32> to vector<8x512xf32>
    %68 = arith.mulf %65, %67 : vector<8x512xf32>
    %69 = arith.truncf %68 : vector<8x512xf32> to vector<8x512xbf16>
    %c0_53 = arith.constant 0 : index
    %c0_54 = arith.constant 0 : index
    %70 = vector.load %arg13[%c0_53, %c0_54] : memref<8x512xbf16, #tpu.memory_space<vmem>>, vector<8x512xbf16>
    tpu.vector_store %arg13[%c0_53, %c0_54], %69 {strides = array<i32>} : memref<8x512xbf16, #tpu.memory_space<vmem>>, vector<8x512xbf16>,
    %c0_55 = arith.constant 0 : index
    %c0_56 = arith.constant 0 : index
    %71 = vector.load %arg13[%c0_55, %c0_56] : memref<8x512xbf16, #tpu.memory_space<vmem>>, vector<8x384xbf16>
    %c0_57 = arith.constant 0 : index
    %c0_58 = arith.constant 0 : index
    %72 = vector.load %arg14[%c0_57, %c0_58] : memref<76x384xbf16, #tpu.memory_space<vmem>>, vector<8x384xbf16>
    tpu.vector_store %arg14[%c0_57, %c0_58], %71 {strides = array<i32>} : memref<76x384xbf16, #tpu.memory_space<vmem>>, vector<8x384xbf16>,
    %c0_59 = arith.constant 0 : index
    %c1_60 = arith.constant 1 : index
    %73 = vector.load %arg13[%c0_59, %c1_60] : memref<8x512xbf16, #tpu.memory_space<vmem>>, vector<8x384xbf16>
    %c8_61 = arith.constant 8 : index
    %c0_62 = arith.constant 0 : index
    %74 = vector.load %arg14[%c8_61, %c0_62] : memref<76x384xbf16, #tpu.memory_space<vmem>>, vector<8x384xbf16>
    tpu.vector_store %arg14[%c8_61, %c0_62], %73 {strides = array<i32>} : memref<76x384xbf16, #tpu.memory_space<vmem>>, vector<8x384xbf16>,
    %c0_63 = arith.constant 0 : index
    %c2_64 = arith.constant 2 : index
    %75 = vector.load %arg13[%c0_63, %c2_64] : memref<8x512xbf16, #tpu.memory_space<vmem>>, vector<8x384xbf16>
    %c16_65 = arith.constant 16 : index
    %c0_66 = arith.constant 0 : index
    %76 = vector.load %arg14[%c16_65, %c0_66] : memref<76x384xbf16, #tpu.memory_space<vmem>>, vector<8x384xbf16>
    tpu.vector_store %arg14[%c16_65, %c0_66], %75 {strides = array<i32>} : memref<76x384xbf16, #tpu.memory_space<vmem>>, vector<8x384xbf16>,
    %c0_67 = arith.constant 0 : index
    %c18_68 = arith.constant 18 : index
    %77 = vector.load %arg13[%c0_67, %c18_68] : memref<8x512xbf16, #tpu.memory_space<vmem>>, vector<8x384xbf16>
    %c24_69 = arith.constant 24 : index
    %c0_70 = arith.constant 0 : index
    %78 = vector.load %arg14[%c24_69, %c0_70] : memref<76x384xbf16, #tpu.memory_space<vmem>>, vector<8x384xbf16>
    tpu.vector_store %arg14[%c24_69, %c0_70], %77 {strides = array<i32>} : memref<76x384xbf16, #tpu.memory_space<vmem>>, vector<8x384xbf16>,
    %c0_71 = arith.constant 0 : index
    %c19_72 = arith.constant 19 : index
    %79 = vector.load %arg13[%c0_71, %c19_72] : memref<8x512xbf16, #tpu.memory_space<vmem>>, vector<8x384xbf16>
    %c32_73 = arith.constant 32 : index
    %c0_74 = arith.constant 0 : index
    %80 = vector.load %arg14[%c32_73, %c0_74] : memref<76x384xbf16, #tpu.memory_space<vmem>>, vector<8x384xbf16>
    tpu.vector_store %arg14[%c32_73, %c0_74], %79 {strides = array<i32>} : memref<76x384xbf16, #tpu.memory_space<vmem>>, vector<8x384xbf16>,
    %c0_75 = arith.constant 0 : index
    %c20_76 = arith.constant 20 : index
    %81 = vector.load %arg13[%c0_75, %c20_76] : memref<8x512xbf16, #tpu.memory_space<vmem>>, vector<8x384xbf16>
    %c40 = arith.constant 40 : index
    %c0_77 = arith.constant 0 : index
    %82 = vector.load %arg14[%c40, %c0_77] : memref<76x384xbf16, #tpu.memory_space<vmem>>, vector<8x384xbf16>
    tpu.vector_store %arg14[%c40, %c0_77], %81 {strides = array<i32>} : memref<76x384xbf16, #tpu.memory_space<vmem>>, vector<8x384xbf16>,
    %c0_78 = arith.constant 0 : index
    %c36_79 = arith.constant 36 : index
    %83 = vector.load %arg13[%c0_78, %c36_79] : memref<8x512xbf16, #tpu.memory_space<vmem>>, vector<8x384xbf16>
    %c48 = arith.constant 48 : index
    %c0_80 = arith.constant 0 : index
    %84 = vector.load %arg14[%c48, %c0_80] : memref<76x384xbf16, #tpu.memory_space<vmem>>, vector<8x384xbf16>
    tpu.vector_store %arg14[%c48, %c0_80], %83 {strides = array<i32>} : memref<76x384xbf16, #tpu.memory_space<vmem>>, vector<8x384xbf16>,
    %c0_81 = arith.constant 0 : index
    %c37_82 = arith.constant 37 : index
    %85 = vector.load %arg13[%c0_81, %c37_82] : memref<8x512xbf16, #tpu.memory_space<vmem>>, vector<8x384xbf16>
    %c56 = arith.constant 56 : index
    %c0_83 = arith.constant 0 : index
    %86 = vector.load %arg14[%c56, %c0_83] : memref<76x384xbf16, #tpu.memory_space<vmem>>, vector<8x384xbf16>
    tpu.vector_store %arg14[%c56, %c0_83], %85 {strides = array<i32>} : memref<76x384xbf16, #tpu.memory_space<vmem>>, vector<8x384xbf16>,
    %c0_84 = arith.constant 0 : index
    %c38_85 = arith.constant 38 : index
    %87 = vector.load %arg13[%c0_84, %c38_85] : memref<8x512xbf16, #tpu.memory_space<vmem>>, vector<8x384xbf16>
    %c64 = arith.constant 64 : index
    %c0_86 = arith.constant 0 : index
    %88 = vector.load %arg14[%c64, %c0_86] : memref<76x384xbf16, #tpu.memory_space<vmem>>, vector<8x384xbf16>
    tpu.vector_store %arg14[%c64, %c0_86], %87 {strides = array<i32>} : memref<76x384xbf16, #tpu.memory_space<vmem>>, vector<8x384xbf16>,
    %c0_87 = arith.constant 0 : index
    %c38_88 = arith.constant 38 : index
    %89 = vector.load %arg11[%c0_87, %c38_88] : memref<4x640xbf16, #tpu.memory_space<vmem>>, vector<4x384xbf16>
    %c72 = arith.constant 72 : index
    %c0_89 = arith.constant 0 : index
    %90 = vector.load %arg14[%c72, %c0_89] : memref<76x384xbf16, #tpu.memory_space<vmem>>, vector<4x384xbf16>
    tpu.vector_store %arg14[%c72, %c0_89], %89 {strides = array<i32>} : memref<76x384xbf16, #tpu.memory_space<vmem>>, vector<4x384xbf16>,
    %c0_90 = arith.constant 0 : index
    %c0_91 = arith.constant 0 : index
    %91 = vector.load %arg5[%c0_90, %c0_91] : memref<16x76xbf16, #tpu.memory_space<vmem>>, vector<16x76xbf16>
    %c0_92 = arith.constant 0 : index
    %c0_93 = arith.constant 0 : index
    %92 = vector.load %arg14[%c0_92, %c0_93] : memref<76x384xbf16, #tpu.memory_space<vmem>>, vector<76x384xbf16>
    %cst_94 = arith.constant dense<0.000000e+00> : vector<16x384xf32>
    %93 = tpu.matmul %91, %92, %cst_94 {dimension_numbers = #tpu.dot_dimension_numbers<[1], [0], [0], [1], [0, 0, 1, 1], [], []>} : vector<16x76xbf16>, vector<76x384xbf16>, vector<16x384xf32> -> vector<16x384xf32>
    %94 = vector.extract_strided_slice %93 {offsets = [0, 0], sizes = [8, 384], strides = [1, 1]} : vector<16x384xf32> to vector<8x384xf32>
    %c0_95 = arith.constant 0 : index
    %c0_96 = arith.constant 0 : index
    %95 = vector.load %arg6[%c0_95, %c0_96] : memref<8x1xf32, #tpu.memory_space<vmem>>, vector<8x1xf32>
    %96 = vector.broadcast %95 : vector<8x1xf32> to vector<8x384xf32>
    %97 = arith.mulf %94, %96 : vector<8x384xf32>
    %c0_97 = arith.constant 0 : index
    %c0_98 = arith.constant 0 : index
    %98 = vector.load %arg7[%c0_97, %c0_98] : memref<8x1xf32, #tpu.memory_space<vmem>>, vector<8x1xf32>
    %99 = vector.broadcast %98 : vector<8x1xf32> to vector<8x384xf32>
    %100 = arith.addf %97, %99 : vector<8x384xf32>
    %cst_99 = arith.constant 0.000000e+00 : f32
    %101 = vector.broadcast %cst_99 : f32 to vector<8x384xf32>
    %102 = arith.maximumf %100, %101 : vector<8x384xf32>
    %103 = vector.extract_strided_slice %93 {offsets = [8, 0], sizes = [8, 384], strides = [1, 1]} : vector<16x384xf32> to vector<8x384xf32>
    %c0_100 = arith.constant 0 : index
    %c0_101 = arith.constant 0 : index
    %104 = vector.load %arg9[%c0_100, %c0_101] : memref<8x1xf32, #tpu.memory_space<vmem>>, vector<8x1xf32>
    %105 = vector.broadcast %104 : vector<8x1xf32> to vector<8x384xf32>
    %106 = arith.addf %103, %105 : vector<8x384xf32>
    %107 = arith.addf %102, %106 : vector<8x384xf32>
    %c0_102 = arith.constant 0 : index
    %c0_103 = arith.constant 0 : index
    %c0_104 = arith.constant 0 : index
    %108 = vector.load %arg10[%c0_102, %c0_103, %c0_104] : memref<1x8x384xf32, #tpu.memory_space<vmem>>, vector<1x8x384xf32>
    %109 = vector.shape_cast %108 : vector<1x8x384xf32> to vector<8x384xf32>
    %110 = vector.shape_cast %107 : vector<8x384xf32> to vector<1x8x384xf32>
    tpu.vector_store %arg10[%c0_102, %c0_103, %c0_104], %110 {strides = array<i32>} : memref<1x8x384xf32, #tpu.memory_space<vmem>>, vector<1x8x384xf32>,
    return
  }
  func.func @transform_0(%arg0: i32) -> (i32, i32, i32) {
    %c0_i32 = arith.constant 0 : i32
    %c0_i32_0 = arith.constant 0 : i32
    %c0_i32_1 = arith.constant 0 : i32
    return %arg0, %c0_i32, %c0_i32_0 : i32, i32, i32
  }
  func.func @transform_1(%arg0: i32) -> (i32, i32) {
    %c0_i32 = arith.constant 0 : i32
    %c0_i32_0 = arith.constant 0 : i32
    %c0_i32_1 = arith.constant 0 : i32
    return %c0_i32, %c0_i32_0 : i32, i32
  }
  func.func @transform_2(%arg0: i32) -> (i32, i32) {
    %c0_i32 = arith.constant 0 : i32
    %c0_i32_0 = arith.constant 0 : i32
    %c0_i32_1 = arith.constant 0 : i32
    return %c0_i32, %c0_i32_0 : i32, i32
  }
  func.func @transform_3(%arg0: i32) -> (i32, i32) {
    %c0_i32 = arith.constant 0 : i32
    %c0_i32_0 = arith.constant 0 : i32
    %c0_i32_1 = arith.constant 0 : i32
    return %c0_i32, %c0_i32_0 : i32, i32
  }
  func.func @transform_4(%arg0: i32) -> (i32, i32) {
    %c0_i32 = arith.constant 0 : i32
    %c0_i32_0 = arith.constant 0 : i32
    %c0_i32_1 = arith.constant 0 : i32
    return %c0_i32, %c0_i32_0 : i32, i32
  }
  func.func @transform_5(%arg0: i32) -> (i32, i32) {
    %c0_i32 = arith.constant 0 : i32
    %c0_i32_0 = arith.constant 0 : i32
    %c0_i32_1 = arith.constant 0 : i32
    return %c0_i32, %c0_i32_0 : i32, i32
  }
  func.func @transform_6(%arg0: i32) -> (i32, i32) {
    %c0_i32 = arith.constant 0 : i32
    %c0_i32_0 = arith.constant 0 : i32
    %c0_i32_1 = arith.constant 0 : i32
    return %c0_i32, %c0_i32_0 : i32, i32
  }
  func.func @transform_7(%arg0: i32) -> (i32, i32) {
    %c0_i32 = arith.constant 0 : i32
    %c0_i32_0 = arith.constant 0 : i32
    %c0_i32_1 = arith.constant 0 : i32
    return %c0_i32, %c0_i32_0 : i32, i32
  }
  func.func @transform_8(%arg0: i32) -> (i32, i32) {
    %c0_i32 = arith.constant 0 : i32
    %c0_i32_0 = arith.constant 0 : i32
    %c0_i32_1 = arith.constant 0 : i32
    return %c0_i32, %c0_i32_0 : i32, i32
  }
  func.func @transform_9(%arg0: i32) -> (i32, i32, i32) {
    %c0_i32 = arith.constant 0 : i32
    %c0_i32_0 = arith.constant 0 : i32
    %c0_i32_1 = arith.constant 0 : i32
    return %arg0, %c0_i32, %c0_i32_0 : i32, i32, i32
  }
}

</mosaic_0001>

<llo_original>
// kernel: tpu_custom_call.1
$region0: #{tpu_custom_call.1}
  #allocation0 [shape = 'u32[]', space=smem, size = 0x4, offset = 0x4, fixed_abs, tag = 'smem constant byte address 0x4 - core index']
  #allocation1 [shape = 'u32[144,128]{1,0:T(1,128)}', space=vmem, size = 0x12000, scoped, tag = 'internal scratch']
  #allocation2 [shape = 'bf16[4,640]{1,0:T(4,128)(2,1)}', space=vmem, size = 0x1400, scoped, tag = 'scratch operand']
  #allocation3 [shape = 'bf16[36,512]{1,0:T(8,128)(2,1)}', space=vmem, size = 0xa000, scoped, tag = 'scratch operand']
  #allocation4 [shape = 'bf16[8,512]{1,0:T(8,128)(2,1)}', space=vmem, size = 0x2000, scoped, tag = 'scratch operand']
  #allocation5 [shape = 'bf16[76,384]{1,0:T(8,128)(2,1)}', space=vmem, size = 0xf000, scoped, tag = 'scratch operand']
  %s0 = inlined_call_operand.vmem [shape: f32[2,4,256], index: 0, kind: input, shape index: {}]
  %s1 = inlined_call_operand.vmem [shape: bf16[8,36], index: 1, kind: input, shape index: {}]
  %s2 = inlined_call_operand.vmem [shape: f32[8,1], index: 2, kind: input, shape index: {}]
  %s3 = inlined_call_operand.vmem [shape: f32[8,1], index: 3, kind: input, shape index: {}]
  %s4 = inlined_call_operand.vmem [shape: bf16[16,76], index: 4, kind: input, shape index: {}]
  %s5 = inlined_call_operand.vmem [shape: f32[8,1], index: 5, kind: input, shape index: {}]
  %s6 = inlined_call_operand.vmem [shape: f32[8,1], index: 6, kind: input, shape index: {}]
  %s7 = inlined_call_operand.vmem [shape: f32[1,512], index: 7, kind: input, shape index: {}]
  %s8 = inlined_call_operand.vmem [shape: f32[8,1], index: 8, kind: input, shape index: {}]
  %s9 = inlined_call_operand.hbm [shape: f32[2,8,384], index: 9, kind: output, shape index: {}]
  %s10 = sld [smem:[#allocation0]]
  $region69: #{tpu_custom_call.1} parent=0
    _
  %s12 = ssub.s32 1, %s10
  %s13 = scalar_select 0, %s12, %s10
  $region1: #{tpu_custom_call.1} parent=0
    #allocation6 [shape = 'u8[24576]{0}', space=vmem, size = 0x6000, scoped, tag = 'output window, operand 0']
    #allocation7 [shape = 's32[2]{0}', space=sflag, size = 0x8, scoped, tag = 'scoped memory for tpu_custom_call.1']
    %14 = vsyncpa [#allocation7], 0
    %s15 = scalar_lea.sflag [#allocation7], 1
    %16 = vsyncpa %s15, 0
    loop: start=0, step=1, limit=4
    $region2: #{tpu_custom_call.1} parent=1 // loop_pre_header
      _
    $region3: #{tpu_custom_call.1} parent=1 // loop_header
      %s18 = sphi 0, %s22
      %p19 = scmp.ge.s32.totalorder %s18, 4
      %s28 = sphi 0, %s30
      %s31 = sphi 0, %s28
      %s32 = sphi 0, %s31
      %s48 = sphi 0, %s32
      %s52 = sphi 0, %s52
      %s54 = sphi 0, %s52
      %s55 = sphi 0, %s54
      %s69 = sphi 0, %s55
      %s73 = sphi 0, %s73
      %s75 = sphi 0, %s73
      %s76 = sphi 0, %s75
      %s90 = sphi 0, %s76
      %s94 = sphi 0, %s94
      %s96 = sphi 0, %s94
      %s97 = sphi 0, %s96
      %s111 = sphi 0, %s97
      %s115 = sphi 0, %s115
      %s117 = sphi 0, %s115
      %s118 = sphi 0, %s117
      %s132 = sphi 0, %s118
      %s136 = sphi 0, %s136
      %s138 = sphi 0, %s136
      %s139 = sphi 0, %s138
      %s153 = sphi 0, %s139
      %s157 = sphi 0, %s157
      %s159 = sphi 0, %s157
      %s160 = sphi 0, %s159
      %s174 = sphi 0, %s160
      %s178 = sphi 0, %s178
      %s180 = sphi 0, %s178
      %s181 = sphi 0, %s180
      %s195 = sphi 0, %s181
      %s199 = sphi 0, %s199
      %s201 = sphi 0, %s199
      %s202 = sphi 0, %s201
      %s216 = sphi 0, %s202
      %s222 = sphi 0, %s224
      %s225 = sphi 0, %s222
      %s226 = sphi 0, %s225
      %s242 = sphi 0, %s226
    $region4: #{tpu_custom_call.1} parent=1 // loop_header_branch
      %21 = sbr.rel (%p19) target = $region8
    $region5: #{tpu_custom_call.1} parent=1 // loop_body
      %s23 = ssub.s32 %s18, 1
      %s24 = ssub.s32 %s18, 2
      %s25 = sadd.s32 %s18, 1
      %s26 = ssub.s32 %s18, %s25
      %p27 = scmp.eq.s32.totalorder %s26, 0
      %s29 = sadd.s32 %s28, 1
      %s30 = scalar_select %p27, %s28, %s29
      %p33 = pneg %p27
      %p34 = scmp.eq.s32.totalorder %s18, 1
      %p35 = por %p33, %p34
      %p36 = scmp.ne.s32.totalorder %s28, %s31
      %p37 = scmp.eq.s32.totalorder %s18, 0
      %p38 = por %p36, %p37
      %p39 = scmp.ne.s32.totalorder %s28, %s31
      %p40 = scmp.eq.s32.totalorder %s23, 1
      %p41 = por %p39, %p40
      %p42 = scmp.ne.s32.totalorder %s31, %s32
      %p43 = scmp.eq.s32.totalorder %s23, 0
      %p44 = por %p42, %p43
      %p45 = scmp.ne.s32.totalorder %s31, %s32
      %p46 = scmp.eq.s32.totalorder %s24, 1
      %p47 = por %p45, %p46
      %p49 = scmp.ne.s32.totalorder %s32, %s48
      %p50 = scmp.eq.s32.totalorder %s24, 0
      %p51 = por %p49, %p50
      %s53 = sadd.s32 %s52, 1
      %p56 = scmp.eq.s32.totalorder %s18, 1
      %p57 = scmp.ne.s32.totalorder %s52, %s54
      %p58 = scmp.eq.s32.totalorder %s18, 0
      %p59 = por %p57, %p58
      %p60 = scmp.ne.s32.totalorder %s52, %s54
      %p61 = scmp.eq.s32.totalorder %s23, 1
      %p62 = por %p60, %p61
      %p63 = scmp.ne.s32.totalorder %s54, %s55
      %p64 = scmp.eq.s32.totalorder %s23, 0
      %p65 = por %p63, %p64
      %p66 = scmp.ne.s32.totalorder %s54, %s55
      %p67 = scmp.eq.s32.totalorder %s24, 1
      %p68 = por %p66, %p67
      %p70 = scmp.ne.s32.totalorder %s55, %s69
      %p71 = scmp.eq.s32.totalorder %s24, 0
      %p72 = por %p70, %p71
      %s74 = sadd.s32 %s73, 1
      %p77 = scmp.eq.s32.totalorder %s18, 1
      %p78 = scmp.ne.s32.totalorder %s73, %s75
      %p79 = scmp.eq.s32.totalorder %s18, 0
      %p80 = por %p78, %p79
      %p81 = scmp.ne.s32.totalorder %s73, %s75
      %p82 = scmp.eq.s32.totalorder %s23, 1
      %p83 = por %p81, %p82
      %p84 = scmp.ne.s32.totalorder %s75, %s76
      %p85 = scmp.eq.s32.totalorder %s23, 0
      %p86 = por %p84, %p85
      %p87 = scmp.ne.s32.totalorder %s75, %s76
      %p88 = scmp.eq.s32.totalorder %s24, 1
      %p89 = por %p87, %p88
      %p91 = scmp.ne.s32.totalorder %s76, %s90
      %p92 = scmp.eq.s32.totalorder %s24, 0
      %p93 = por %p91, %p92
      %s95 = sadd.s32 %s94, 1
      %p98 = scmp.eq.s32.totalorder %s18, 1
      %p99 = scmp.ne.s32.totalorder %s94, %s96
      %p100 = scmp.eq.s32.totalorder %s18, 0
      %p101 = por %p99, %p100
      %p102 = scmp.ne.s32.totalorder %s94, %s96
      %p103 = scmp.eq.s32.totalorder %s23, 1
      %p104 = por %p102, %p103
      %p105 = scmp.ne.s32.totalorder %s96, %s97
      %p106 = scmp.eq.s32.totalorder %s23, 0
      %p107 = por %p105, %p106
      %p108 = scmp.ne.s32.totalorder %s96, %s97
      %p109 = scmp.eq.s32.totalorder %s24, 1
      %p110 = por %p108, %p109
      %p112 = scmp.ne.s32.totalorder %s97, %s111
      %p113 = scmp.eq.s32.totalorder %s24, 0
      %p114 = por %p112, %p113
      %s116 = sadd.s32 %s115, 1
      %p119 = scmp.eq.s32.totalorder %s18, 1
      %p120 = scmp.ne.s32.totalorder %s115, %s117
      %p121 = scmp.eq.s32.totalorder %s18, 0
      %p122 = por %p120, %p121
      %p123 = scmp.ne.s32.totalorder %s115, %s117
      %p124 = scmp.eq.s32.totalorder %s23, 1
      %p125 = por %p123, %p124
      %p126 = scmp.ne.s32.totalorder %s117, %s118
      %p127 = scmp.eq.s32.totalorder %s23, 0
      %p128 = por %p126, %p127
      %p129 = scmp.ne.s32.totalorder %s117, %s118
      %p130 = scmp.eq.s32.totalorder %s24, 1
      %p131 = por %p129, %p130
      %p133 = scmp.ne.s32.totalorder %s118, %s132
      %p134 = scmp.eq.s32.totalorder %s24, 0
      %p135 = por %p133, %p134
      %s137 = sadd.s32 %s136, 1
      %p140 = scmp.eq.s32.totalorder %s18, 1
      %p141 = scmp.ne.s32.totalorder %s136, %s138
      %p142 = scmp.eq.s32.totalorder %s18, 0
      %p143 = por %p141, %p142
      %p144 = scmp.ne.s32.totalorder %s136, %s138
      %p145 = scmp.eq.s32.totalorder %s23, 1
      %p146 = por %p144, %p145
      %p147 = scmp.ne.s32.totalorder %s138, %s139
      %p148 = scmp.eq.s32.totalorder %s23, 0
      %p149 = por %p147, %p148
      %p150 = scmp.ne.s32.totalorder %s138, %s139
      %p151 = scmp.eq.s32.totalorder %s24, 1
      %p152 = por %p150, %p151
      %p154 = scmp.ne.s32.totalorder %s139, %s153
      %p155 = scmp.eq.s32.totalorder %s24, 0
      %p156 = por %p154, %p155
      %s158 = sadd.s32 %s157, 1
      %p161 = scmp.eq.s32.totalorder %s18, 1
      %p162 = scmp.ne.s32.totalorder %s157, %s159
      %p163 = scmp.eq.s32.totalorder %s18, 0
      %p164 = por %p162, %p163
      %p165 = scmp.ne.s32.totalorder %s157, %s159
      %p166 = scmp.eq.s32.totalorder %s23, 1
      %p167 = por %p165, %p166
      %p168 = scmp.ne.s32.totalorder %s159, %s160
      %p169 = scmp.eq.s32.totalorder %s23, 0
      %p170 = por %p168, %p169
      %p171 = scmp.ne.s32.totalorder %s159, %s160
      %p172 = scmp.eq.s32.totalorder %s24, 1
      %p173 = por %p171, %p172
      %p175 = scmp.ne.s32.totalorder %s160, %s174
      %p176 = scmp.eq.s32.totalorder %s24, 0
      %p177 = por %p175, %p176
      %s179 = sadd.s32 %s178, 1
      %p182 = scmp.eq.s32.totalorder %s18, 1
      %p183 = scmp.ne.s32.totalorder %s178, %s180
      %p184 = scmp.eq.s32.totalorder %s18, 0
      %p185 = por %p183, %p184
      %p186 = scmp.ne.s32.totalorder %s178, %s180
      %p187 = scmp.eq.s32.totalorder %s23, 1
      %p188 = por %p186, %p187
      %p189 = scmp.ne.s32.totalorder %s180, %s181
      %p190 = scmp.eq.s32.totalorder %s23, 0
      %p191 = por %p189, %p190
      %p192 = scmp.ne.s32.totalorder %s180, %s181
      %p193 = scmp.eq.s32.totalorder %s24, 1
      %p194 = por %p192, %p193
      %p196 = scmp.ne.s32.totalorder %s181, %s195
      %p197 = scmp.eq.s32.totalorder %s24, 0
      %p198 = por %p196, %p197
      %s200 = sadd.s32 %s199, 1
      %p203 = scmp.eq.s32.totalorder %s18, 1
      %p204 = scmp.ne.s32.totalorder %s199, %s201
      %p205 = scmp.eq.s32.totalorder %s18, 0
      %p206 = por %p204, %p205
      %p207 = scmp.ne.s32.totalorder %s199, %s201
      %p208 = scmp.eq.s32.totalorder %s23, 1
      %p209 = por %p207, %p208
      %p210 = scmp.ne.s32.totalorder %s201, %s202
      %p211 = scmp.eq.s32.totalorder %s23, 0
      %p212 = por %p210, %p211
      %p213 = scmp.ne.s32.totalorder %s201, %s202
      %p214 = scmp.eq.s32.totalorder %s24, 1
      %p215 = por %p213, %p214
      %p217 = scmp.ne.s32.totalorder %s202, %s216
      %p218 = scmp.eq.s32.totalorder %s24, 0
      %p219 = por %p217, %p218
      %s220 = ssub.s32 %s18, %s25
      %p221 = scmp.eq.s32.totalorder %s220, 0
      %s223 = sadd.s32 %s222, 1
      %s224 = scalar_select %p221, %s222, %s223
      %p227 = pneg %p221
      %p228 = scmp.eq.s32.totalorder %s18, 1
      %p229 = por %p227, %p228
      %p230 = scmp.ne.s32.totalorder %s222, %s225
      %p231 = scmp.eq.s32.totalorder %s18, 0
      %p232 = por %p230, %p231
      %p233 = scmp.ne.s32.totalorder %s222, %s225
      %p234 = scmp.eq.s32.totalorder %s23, 1
      %p235 = por %p233, %p234
      %p236 = scmp.ne.s32.totalorder %s225, %s226
      %p237 = scmp.eq.s32.totalorder %s23, 0
      %p238 = por %p236, %p237
      %p239 = scmp.ne.s32.totalorder %s225, %s226
      %p240 = scmp.eq.s32.totalorder %s24, 1
      %p241 = por %p239, %p240
      %p243 = scmp.ne.s32.totalorder %s226, %s242
      %p244 = scmp.eq.s32.totalorder %s24, 0
      %p245 = por %p243, %p244
      %p246 = scmp.le.s32.totalorder 1, %s18
      %p247 = scmp.lt.s32.totalorder %s18, 3
      %p248 = pnand %p246, %p247
      %p249 = pneg %p248
      // Predicated region
      $region9: #{tpu_custom_call.1} parent=5 // pred_check
        _
      $region10: #{tpu_custom_call.1} parent=5 // pred_check_branch
        %251 = sbr.rel (%p248) target = $region12
      $region11: #{tpu_custom_call.1} parent=5 // pred_region
        %s252 = ssub.s32 %s18, 1
        // Predicated region
        $region13: #{tpu_custom_call.1} parent=11 // pred_check
          %p253 = pneg %p65
        $region14: #{tpu_custom_call.1} parent=11 // pred_check_branch
          %255 = sbr.rel (%p253) target = $region16
        $region15: #{tpu_custom_call.1} parent=11 // pred_region
          _
        $region16: #{tpu_custom_call.1} parent=11 // pred_fallthru
          _
        // Predicated region
        $region17: #{tpu_custom_call.1} parent=11 // pred_check
          %p256 = pneg %p86
        $region18: #{tpu_custom_call.1} parent=11 // pred_check_branch
          %258 = sbr.rel (%p256) target = $region20
        $region19: #{tpu_custom_call.1} parent=11 // pred_region
          _
        $region20: #{tpu_custom_call.1} parent=11 // pred_fallthru
          _
        // Predicated region
        $region21: #{tpu_custom_call.1} parent=11 // pred_check
          %p259 = pneg %p107
        $region22: #{tpu_custom_call.1} parent=11 // pred_check_branch
          %261 = sbr.rel (%p259) target = $region24
        $region23: #{tpu_custom_call.1} parent=11 // pred_region
          _
        $region24: #{tpu_custom_call.1} parent=11 // pred_fallthru
          _
        // Predicated region
        $region25: #{tpu_custom_call.1} parent=11 // pred_check
          %p262 = pneg %p128
        $region26: #{tpu_custom_call.1} parent=11 // pred_check_branch
          %264 = sbr.rel (%p262) target = $region28
        $region27: #{tpu_custom_call.1} parent=11 // pred_region
          _
        $region28: #{tpu_custom_call.1} parent=11 // pred_fallthru
          _
        // Predicated region
        $region29: #{tpu_custom_call.1} parent=11 // pred_check
          %p265 = pneg %p149
        $region30: #{tpu_custom_call.1} parent=11 // pred_check_branch
          %267 = sbr.rel (%p265) target = $region32
        $region31: #{tpu_custom_call.1} parent=11 // pred_region
          _
        $region32: #{tpu_custom_call.1} parent=11 // pred_fallthru
          _
        // Predicated region
        $region33: #{tpu_custom_call.1} parent=11 // pred_check
          %p268 = pneg %p170
        $region34: #{tpu_custom_call.1} parent=11 // pred_check_branch
          %270 = sbr.rel (%p268) target = $region36
        $region35: #{tpu_custom_call.1} parent=11 // pred_region
          _
        $region36: #{tpu_custom_call.1} parent=11 // pred_fallthru
          _
        // Predicated region
        $region37: #{tpu_custom_call.1} parent=11 // pred_check
          %p271 = pneg %p191
        $region38: #{tpu_custom_call.1} parent=11 // pred_check_branch
          %273 = sbr.rel (%p271) target = $region40
        $region39: #{tpu_custom_call.1} parent=11 // pred_region
          _
        $region40: #{tpu_custom_call.1} parent=11 // pred_fallthru
          _
        // Predicated region
        $region41: #{tpu_custom_call.1} parent=11 // pred_check
          %p274 = pneg %p212
        $region42: #{tpu_custom_call.1} parent=11 // pred_check_branch
          %276 = sbr.rel (%p274) target = $region44
        $region43: #{tpu_custom_call.1} parent=11 // pred_region
          _
        $region44: #{tpu_custom_call.1} parent=11 // pred_fallthru
          _
      $region12: #{tpu_custom_call.1} parent=5 // pred_fallthru
        _
      %p277 = scmp.lt.s32.totalorder %s18, 2
      // Predicated region
      $region45: #{tpu_custom_call.1} parent=5 // pred_check
        %p278 = pneg %p277
      $region46: #{tpu_custom_call.1} parent=5 // pred_check_branch
        %280 = sbr.rel (%p278) target = $region48
      $region47: #{tpu_custom_call.1} parent=5 // pred_region
        // Predicated region
        $region49: #{tpu_custom_call.1} parent=47 // pred_check
          %p281 = pneg %p38
        $region50: #{tpu_custom_call.1} parent=47 // pred_check_branch
          %283 = sbr.rel (%p281) target = $region52
        $region51: #{tpu_custom_call.1} parent=47 // pred_region
          %p284 = scmp.lt.s32.totalorder %s18, 1
          %s285 = scalar_select %p284, %s18, 1
          %s286 = smul.addr %s285, 2
          %s287 = smul.addr %s286, 4
          %s288 = scalar_lea.vmem %s0, %s287
        $region52: #{tpu_custom_call.1} parent=47 // pred_fallthru
          _
      $region48: #{tpu_custom_call.1} parent=5 // pred_fallthru
        _
      %p289 = scmp.le.s32.totalorder 1, %s18
      %p290 = scmp.lt.s32.totalorder %s18, 3
      %p291 = pnand %p289, %p290
      %p292 = pneg %p291
      // Predicated region
      $region53: #{tpu_custom_call.1} parent=5 // pred_check
        _
      $region54: #{tpu_custom_call.1} parent=5 // pred_check_branch
        %294 = sbr.rel (%p291) target = $region56
      $region55: #{tpu_custom_call.1} parent=5 // pred_region
        %s295 = ssub.s32 %s18, 1
        %p296 = scmp.lt.s32.totalorder %s23, 1
        %s297 = scalar_select %p296, %s23, 1
        %s298 = smul.addr %s297, 2
        %s299 = smul.addr %s298, 4
        %s300 = scalar_lea.vmem %s0, %s299
        %p301 = pneg %p44
        %p302 = pneg %p41
        %p303 = pneg %p65
        %p304 = pneg %p62
        %p305 = pneg %p86
        %p306 = pneg %p83
        %p307 = pneg %p107
        %p308 = pneg %p104
        %p309 = pneg %p128
        %p310 = pneg %p125
        %p311 = pneg %p149
        %p312 = pneg %p146
        %p313 = pneg %p170
        %p314 = pneg %p167
        %p315 = pneg %p191
        %p316 = pneg %p188
        %p317 = pneg %p212
        %p318 = pneg %p209
        %p319 = pneg %p238
        %p320 = pneg %p235
        %s321 = sand.u32 %s225, 1
        %s322 = scalar_lea.sflag [#allocation7], %s321
        %s323 = sand.u32 %s225, 1
        %s324 = smul.addr %s323, 24
        %s325 = scalar_lea.vmem [#allocation6], %s324
        %p326 = scmp.lt.s32.totalorder %s23, 1
        %s327 = scalar_select %p326, %s23, 1
        %s328 = smul.addr %s327, 2
        %s329 = smul.addr %s328, 4
        %s330 = scalar_lea.vmem %s0, %s329
        %332 = vst [vmem:[#allocation2] sm:$0xff] 0
        %333 = vst [vmem:[#allocation2 + $0x8] sm:$0x3] 0
        %v334 = vld [vmem:[%s330] sm:$0xff]
        %v336 = vcombine.high %v334, %v334
        %v338 = vpack.c.bf16 %v334, %v334
        %v339 = vpack.c.bf16 %v336, %v336
        %v342 = vunpack.c.l.s4 1983009808
        %v343 = vunpack.c.0.s8 %v342
        %v344 = vlaneseq
        %v345 = vshrl.u32 %v344, 7
        %v346 = vsub.s32 %v343, %v345
        %v347 = vrot.slane %v338, %v346
        %348 = vrot.lane.b32.xlu0 %v347, 57
        %v349 = vpop.permute.xlu0 %348
        %vm351 = vcmask 591304
        %352 = vst.msk [vmem:[#allocation2] sm:$0x3] %vm351, %v349
        %353 = vrot.lane.b32.xlu0 %v347, 59
        %v354 = vpop.permute.xlu0 %353
        %vm356 = vcmask 738904
        %357 = vst.msk [vmem:[#allocation2] sm:$0x3] %vm356, %v354
        %358 = vrot.lane.b32.xlu0 %v347, 61
        %v359 = vpop.permute.xlu0 %358
        %vm361 = vcmask 886504
        %362 = vst.msk [vmem:[#allocation2] sm:$0x3] %vm361, %v359
        %363 = vrot.lane.b32.xlu0 %v347, 63
        %v364 = vpop.permute.xlu0 %363
        %vm366 = vcmask 1034104
        %367 = vst.msk [vmem:[#allocation2] sm:$0x3] %vm366, %v364
        %368 = vrot.lane.b32.xlu0 %v347, 65
        %v369 = vpop.permute.xlu0 %368
        %vm371 = vcmask 132104
        %372 = vst.msk [vmem:[#allocation2 + $0x2] sm:$0x3] %vm371, %v369
        %373 = vrot.lane.b32.xlu0 %v347, 67
        %v374 = vpop.permute.xlu0 %373
        %vm376 = vcmask 279704
        %377 = vst.msk [vmem:[#allocation2 + $0x2] sm:$0x3] %vm376, %v374
        %378 = vrot.lane.b32.xlu0 %v347, 69
        %v379 = vpop.permute.xlu0 %378
        %vm381 = vcmask 427304
        %382 = vst.msk [vmem:[#allocation2 + $0x2] sm:$0x3] %vm381, %v379
        %383 = vrot.lane.b32.xlu0 %v347, 71
        %v384 = vpop.permute.xlu0 %383
        %vm386 = vcmask 574904
        %387 = vst.msk [vmem:[#allocation2 + $0x2] sm:$0x3] %vm386, %v384
        %v390 = vunpack.c.l.s4 1983009808
        %v391 = vunpack.c.0.s8 %v390
        %v392 = vlaneseq
        %v393 = vshrl.u32 %v392, 7
        %v394 = vsub.s32 %v391, %v393
        %v395 = vrot.slane %v339, %v394
        %396 = vrot.lane.b32.xlu0 %v395, 73
        %v397 = vpop.permute.xlu0 %396
        %vm399 = vcmask 722504
        %400 = vst.msk [vmem:[#allocation2 + $0x2] sm:$0x3] %vm399, %v397
        %401 = vrot.lane.b32.xlu0 %v395, 75
        %v402 = vpop.permute.xlu0 %401
        %vm404 = vcmask 870104
        %405 = vst.msk [vmem:[#allocation2 + $0x2] sm:$0x3] %vm404, %v402
        %406 = vrot.lane.b32.xlu0 %v395, 77
        %v407 = vpop.permute.xlu0 %406
        %vm409 = vcmask 1017704
        %410 = vst.msk [vmem:[#allocation2 + $0x2] sm:$0x3] %vm409, %v407
        %411 = vrot.lane.b32.xlu0 %v395, 79
        %v412 = vpop.permute.xlu0 %411
        %v413 = vrot.slane %v412, 6
        %vm414 = vcmask 646144
        %v415 = vsel %vm414, %v413, %v412
        %vm417 = vcmask 1042424
        %vm418 = vcmask 117762
        %vm419 = vmor %vm418, %vm417
        %420 = vst.msk [vmem:[#allocation2 + $0x2] sm:$0xf] %vm419, %v415
        %421 = vrot.lane.b32.xlu0 %v395, 81
        %v422 = vpop.permute.xlu0 %421
        %vm424 = vcmask 263304
        %425 = vst.msk [vmem:[#allocation2 + $0x4] sm:$0x3] %vm424, %v422
        %426 = vrot.lane.b32.xlu0 %v395, 83
        %v427 = vpop.permute.xlu0 %426
        %vm429 = vcmask 410904
        %430 = vst.msk [vmem:[#allocation2 + $0x4] sm:$0x3] %vm429, %v427
        %431 = vrot.lane.b32.xlu0 %v395, 85
        %v432 = vpop.permute.xlu0 %431
        %vm434 = vcmask 558504
        %435 = vst.msk [vmem:[#allocation2 + $0x4] sm:$0x3] %vm434, %v432
        %436 = vrot.lane.b32.xlu0 %v395, 87
        %v437 = vpop.permute.xlu0 %436
        %vm439 = vcmask 706104
        %440 = vst.msk [vmem:[#allocation2 + $0x4] sm:$0x3] %vm439, %v437
        %v441 = vld [vmem:[#allocation2] sm:$0xff]
        %v443 = vcombine.high %v441, %v441
        %v445 = vunpack.c.l.s4 1983009808
        %v446 = vunpack.c.0.s8 %v445
        %v447 = vlaneseq
        %v448 = vshrl.u32 %v447, 7
        %v449 = vsub.s32 %v446, %v448
        %v450 = vrot.slane %v441, %v449
        %v452 = vunpack.c.l.s4 1983009808
        %v453 = vunpack.c.0.s8 %v452
        %v454 = vlaneseq
        %v455 = vshrl.u32 %v454, 7
        %v456 = vsub.s32 %v453, %v455
        %v457 = vrot.slane %v443, %v456
        %460 = vst [vmem:[#allocation3] sm:$0x33] %v450
        %461 = vst [vmem:[#allocation3 + $0x8] sm:$0x33] %v457
        %v462 = vld [vmem:[#allocation2] sm:$0xff]
        %v463 = vld [vmem:[#allocation2 + $0x8] sm:$0x3]
        %v466 = vcombine.low %v462, %v462
        %v468 = vunpack.c.l.s4 1983009808
        %v469 = vunpack.c.0.s8 %v468
        %v470 = vlaneseq
        %v471 = vshrl.u32 %v470, 7
        %v472 = vsub.s32 %v469, %v471
        %v473 = vrot.slane %v466, %v472
        %v475 = vunpack.c.l.s4 1983009808
        %v476 = vunpack.c.0.s8 %v475
        %v477 = vlaneseq
        %v478 = vshrl.u32 %v477, 7
        %v479 = vsub.s32 %v476, %v478
        %v480 = vrot.slane %v462, %v479
        %v481 = vcombine.low %v463, %v463
        %v483 = vunpack.c.l.s4 1983009808
        %v484 = vunpack.c.0.s8 %v483
        %v485 = vlaneseq
        %v486 = vshrl.u32 %v485, 7
        %v487 = vsub.s32 %v484, %v486
        %v488 = vrot.slane %v481, %v487
        %489 = vrot.lane.b32.xlu0 %v473, 127
        %v490 = vpop.permute.xlu0 %489
        %491 = vrot.lane.b32.xlu0 %v480, 127
        %v492 = vpop.permute.xlu0 %491
        %493 = vrot.lane.b32.xlu0 %v488, 127
        %v494 = vpop.permute.xlu0 %493
        %v495 = vrot.slane %v490, 4
        %v496 = vrot.slane %v492, 4
        %v497 = vrot.slane %v494, 4
        %vm498 = vcmask 1043456
        %v499 = vsel %vm498, %v495, %v496
        %vm500 = vcmask 1039360
        %v501 = vsel %vm500, %v490, %v499
        %v502 = vsel %vm498, %v496, %v497
        %v503 = vsel %vm500, %v492, %v502
        %506 = vst [vmem:[#allocation3] sm:$0xcc] %v501
        %507 = vst [vmem:[#allocation3 + $0x8] sm:$0xcc] %v503
        %v508 = vld [vmem:[#allocation2] sm:$0xff]
        %v509 = vld [vmem:[#allocation2 + $0x8] sm:$0x3]
        %v512 = vcombine.high %v508, %v508
        %v514 = vunpack.c.l.s4 1983009808
        %v515 = vunpack.c.0.s8 %v514
        %v516 = vlaneseq
        %v517 = vshrl.u32 %v516, 7
        %v518 = vsub.s32 %v515, %v517
        %v519 = vrot.slane %v508, %v518
        %v521 = vunpack.c.l.s4 1983009808
        %v522 = vunpack.c.0.s8 %v521
        %v523 = vlaneseq
        %v524 = vshrl.u32 %v523, 7
        %v525 = vsub.s32 %v522, %v524
        %v526 = vrot.slane %v512, %v525
        %v528 = vunpack.c.l.s4 1983009808
        %v529 = vunpack.c.0.s8 %v528
        %v530 = vlaneseq
        %v531 = vshrl.u32 %v530, 7
        %v532 = vsub.s32 %v529, %v531
        %v533 = vrot.slane %v509, %v532
        %534 = vrot.lane.b32.xlu0 %v519, 126
        %v535 = vpop.permute.xlu0 %534
        %536 = vrot.lane.b32.xlu0 %v526, 126
        %v537 = vpop.permute.xlu0 %536
        %538 = vrot.lane.b32.xlu0 %v533, 126
        %v539 = vpop.permute.xlu0 %538
        %v540 = vrot.slane %v535, 4
        %v541 = vrot.slane %v537, 4
        %v542 = vrot.slane %v539, 4
        %v543 = vsel %vm498, %v540, %v541
        %vm544 = vcmask 1031168
        %v545 = vsel %vm544, %v535, %v543
        %v546 = vsel %vm498, %v541, %v542
        %v547 = vsel %vm544, %v537, %v546
        %550 = vst [vmem:[#allocation3 + $0x10] sm:$0x33] %v545
        %551 = vst [vmem:[#allocation3 + $0x18] sm:$0x33] %v547
        %v552 = vld [vmem:[#allocation2] sm:$0xff]
        %v553 = vld [vmem:[#allocation2 + $0x8] sm:$0x3]
        %v556 = vcombine.low %v552, %v552
        %v558 = vunpack.c.l.s4 1983009808
        %v559 = vunpack.c.0.s8 %v558
        %v560 = vlaneseq
        %v561 = vshrl.u32 %v560, 7
        %v562 = vsub.s32 %v559, %v561
        %v563 = vrot.slane %v556, %v562
        %v565 = vunpack.c.l.s4 1983009808
        %v566 = vunpack.c.0.s8 %v565
        %v567 = vlaneseq
        %v568 = vshrl.u32 %v567, 7
        %v569 = vsub.s32 %v566, %v568
        %v570 = vrot.slane %v552, %v569
        %v571 = vcombine.low %v553, %v553
        %v573 = vunpack.c.l.s4 1983009808
        %v574 = vunpack.c.0.s8 %v573
        %v575 = vlaneseq
        %v576 = vshrl.u32 %v575, 7
        %v577 = vsub.s32 %v574, %v576
        %v578 = vrot.slane %v571, %v577
        %579 = vrot.lane.b32.xlu0 %v563, 110
        %v580 = vpop.permute.xlu0 %579
        %581 = vrot.lane.b32.xlu0 %v570, 110
        %v582 = vpop.permute.xlu0 %581
        %583 = vrot.lane.b32.xlu0 %v578, 110
        %v584 = vpop.permute.xlu0 %583
        %v585 = vrot.slane %v580, 4
        %v586 = vrot.slane %v582, 4
        %v587 = vrot.slane %v584, 4
        %v588 = vsel %vm498, %v585, %v586
        %vm589 = vcmask 900096
        %v590 = vsel %vm589, %v580, %v588
        %v591 = vsel %vm498, %v586, %v587
        %v592 = vsel %vm589, %v582, %v591
        %595 = vst [vmem:[#allocation3 + $0x10] sm:$0xcc] %v590
        %596 = vst [vmem:[#allocation3 + $0x18] sm:$0xcc] %v592
        %v597 = vld [vmem:[#allocation2] sm:$0xff]
        %v598 = vld [vmem:[#allocation2 + $0x8] sm:$0x3]
        %v601 = vcombine.high %v597, %v597
        %v603 = vunpack.c.l.s4 1983009808
        %v604 = vunpack.c.0.s8 %v603
        %v605 = vlaneseq
        %v606 = vshrl.u32 %v605, 7
        %v607 = vsub.s32 %v604, %v606
        %v608 = vrot.slane %v597, %v607
        %v610 = vunpack.c.l.s4 1983009808
        %v611 = vunpack.c.0.s8 %v610
        %v612 = vlaneseq
        %v613 = vshrl.u32 %v612, 7
        %v614 = vsub.s32 %v611, %v613
        %v615 = vrot.slane %v601, %v614
        %v617 = vunpack.c.l.s4 1983009808
        %v618 = vunpack.c.0.s8 %v617
        %v619 = vlaneseq
        %v620 = vshrl.u32 %v619, 7
        %v621 = vsub.s32 %v618, %v620
        %v622 = vrot.slane %v598, %v621
        %623 = vrot.lane.b32.xlu0 %v608, 109
        %v624 = vpop.permute.xlu0 %623
        %625 = vrot.lane.b32.xlu0 %v615, 109
        %v626 = vpop.permute.xlu0 %625
        %627 = vrot.lane.b32.xlu0 %v622, 109
        %v628 = vpop.permute.xlu0 %627
        %v629 = vrot.slane %v624, 4
        %v630 = vrot.slane %v626, 4
        %v631 = vrot.slane %v628, 4
        %v632 = vsel %vm498, %v629, %v630
        %vm633 = vcmask 891904
        %v634 = vsel %vm633, %v624, %v632
        %v635 = vsel %vm498, %v630, %v631
        %v636 = vsel %vm633, %v626, %v635
        %639 = vst [vmem:[#allocation3 + $0x20] sm:$0x33] %v634
        %640 = vst [vmem:[#allocation3 + $0x28] sm:$0x33] %v636
        %v641 = vld [vmem:[#allocation2] sm:$0xff]
        %v642 = vld [vmem:[#allocation2 + $0x8] sm:$0x3]
        %v645 = vcombine.low %v641, %v641
        %v647 = vunpack.c.l.s4 1983009808
        %v648 = vunpack.c.0.s8 %v647
        %v649 = vlaneseq
        %v650 = vshrl.u32 %v649, 7
        %v651 = vsub.s32 %v648, %v650
        %v652 = vrot.slane %v645, %v651
        %v654 = vunpack.c.l.s4 1983009808
        %v655 = vunpack.c.0.s8 %v654
        %v656 = vlaneseq
        %v657 = vshrl.u32 %v656, 7
        %v658 = vsub.s32 %v655, %v657
        %v659 = vrot.slane %v641, %v658
        %v660 = vcombine.low %v642, %v642
        %v662 = vunpack.c.l.s4 1983009808
        %v663 = vunpack.c.0.s8 %v662
        %v664 = vlaneseq
        %v665 = vshrl.u32 %v664, 7
        %v666 = vsub.s32 %v663, %v665
        %v667 = vrot.slane %v660, %v666
        %668 = vrot.lane.b32.xlu0 %v652, 108
        %v669 = vpop.permute.xlu0 %668
        %670 = vrot.lane.b32.xlu0 %v659, 108
        %v671 = vpop.permute.xlu0 %670
        %672 = vrot.lane.b32.xlu0 %v667, 108
        %v673 = vpop.permute.xlu0 %672
        %v674 = vrot.slane %v669, 4
        %v675 = vrot.slane %v671, 4
        %v676 = vrot.slane %v673, 4
        %v677 = vsel %vm498, %v674, %v675
        %vm678 = vcmask 883712
        %v679 = vsel %vm678, %v669, %v677
        %v680 = vsel %vm498, %v675, %v676
        %v681 = vsel %vm678, %v671, %v680
        %684 = vst [vmem:[#allocation3 + $0x20] sm:$0xcc] %v679
        %685 = vst [vmem:[#allocation3 + $0x28] sm:$0xcc] %v681
        %v686 = vld [vmem:[#allocation2] sm:$0xff]
        %v687 = vld [vmem:[#allocation2 + $0x8] sm:$0x3]
        %v690 = vcombine.high %v686, %v686
        %v692 = vunpack.c.l.s4 1983009808
        %v693 = vunpack.c.0.s8 %v692
        %v694 = vlaneseq
        %v695 = vshrl.u32 %v694, 7
        %v696 = vsub.s32 %v693, %v695
        %v697 = vrot.slane %v686, %v696
        %v699 = vunpack.c.l.s4 1983009808
        %v700 = vunpack.c.0.s8 %v699
        %v701 = vlaneseq
        %v702 = vshrl.u32 %v701, 7
        %v703 = vsub.s32 %v700, %v702
        %v704 = vrot.slane %v690, %v703
        %v706 = vunpack.c.l.s4 1983009808
        %v707 = vunpack.c.0.s8 %v706
        %v708 = vlaneseq
        %v709 = vshrl.u32 %v708, 7
        %v710 = vsub.s32 %v707, %v709
        %v711 = vrot.slane %v687, %v710
        %712 = vrot.lane.b32.xlu0 %v697, 92
        %v713 = vpop.permute.xlu0 %712
        %714 = vrot.lane.b32.xlu0 %v704, 92
        %v715 = vpop.permute.xlu0 %714
        %716 = vrot.lane.b32.xlu0 %v711, 92
        %v717 = vpop.permute.xlu0 %716
        %v718 = vrot.slane %v713, 4
        %v719 = vrot.slane %v715, 4
        %v720 = vrot.slane %v717, 4
        %v721 = vsel %vm498, %v718, %v719
        %vm722 = vcmask 752640
        %v723 = vsel %vm722, %v713, %v721
        %v724 = vsel %vm498, %v719, %v720
        %v725 = vsel %vm722, %v715, %v724
        %728 = vst [vmem:[#allocation3 + $0x30] sm:$0x33] %v723
        %729 = vst [vmem:[#allocation3 + $0x38] sm:$0x33] %v725
        %v730 = vld [vmem:[#allocation2] sm:$0xff]
        %v731 = vld [vmem:[#allocation2 + $0x8] sm:$0x3]
        %v734 = vcombine.low %v730, %v730
        %v736 = vunpack.c.l.s4 1983009808
        %v737 = vunpack.c.0.s8 %v736
        %v738 = vlaneseq
        %v739 = vshrl.u32 %v738, 7
        %v740 = vsub.s32 %v737, %v739
        %v741 = vrot.slane %v734, %v740
        %v743 = vunpack.c.l.s4 1983009808
        %v744 = vunpack.c.0.s8 %v743
        %v745 = vlaneseq
        %v746 = vshrl.u32 %v745, 7
        %v747 = vsub.s32 %v744, %v746
        %v748 = vrot.slane %v730, %v747
        %v749 = vcombine.low %v731, %v731
        %v751 = vunpack.c.l.s4 1983009808
        %v752 = vunpack.c.0.s8 %v751
        %v753 = vlaneseq
        %v754 = vshrl.u32 %v753, 7
        %v755 = vsub.s32 %v752, %v754
        %v756 = vrot.slane %v749, %v755
        %757 = vrot.lane.b32.xlu0 %v741, 91
        %v758 = vpop.permute.xlu0 %757
        %759 = vrot.lane.b32.xlu0 %v748, 91
        %v760 = vpop.permute.xlu0 %759
        %761 = vrot.lane.b32.xlu0 %v756, 91
        %v762 = vpop.permute.xlu0 %761
        %v763 = vrot.slane %v758, 4
        %v764 = vrot.slane %v760, 4
        %v765 = vrot.slane %v762, 4
        %v766 = vsel %vm498, %v763, %v764
        %vm767 = vcmask 744448
        %v768 = vsel %vm767, %v758, %v766
        %v769 = vsel %vm498, %v764, %v765
        %v770 = vsel %vm767, %v760, %v769
        %773 = vst [vmem:[#allocation3 + $0x30] sm:$0xcc] %v768
        %774 = vst [vmem:[#allocation3 + $0x38] sm:$0xcc] %v770
        %v775 = vld [vmem:[#allocation2] sm:$0xff]
        %v776 = vld [vmem:[#allocation2 + $0x8] sm:$0x3]
        %v779 = vcombine.high %v775, %v775
        %v781 = vunpack.c.l.s4 1983009808
        %v782 = vunpack.c.0.s8 %v781
        %v783 = vlaneseq
        %v784 = vshrl.u32 %v783, 7
        %v785 = vsub.s32 %v782, %v784
        %v786 = vrot.slane %v775, %v785
        %v788 = vunpack.c.l.s4 1983009808
        %v789 = vunpack.c.0.s8 %v788
        %v790 = vlaneseq
        %v791 = vshrl.u32 %v790, 7
        %v792 = vsub.s32 %v789, %v791
        %v793 = vrot.slane %v779, %v792
        %v795 = vunpack.c.l.s4 1983009808
        %v796 = vunpack.c.0.s8 %v795
        %v797 = vlaneseq
        %v798 = vshrl.u32 %v797, 7
        %v799 = vsub.s32 %v796, %v798
        %v800 = vrot.slane %v776, %v799
        %801 = vrot.lane.b32.xlu0 %v786, 90
        %v802 = vpop.permute.xlu0 %801
        %803 = vrot.lane.b32.xlu0 %v793, 90
        %v804 = vpop.permute.xlu0 %803
        %805 = vrot.lane.b32.xlu0 %v800, 90
        %v806 = vpop.permute.xlu0 %805
        %v807 = vrot.slane %v802, 4
        %v808 = vrot.slane %v804, 4
        %v809 = vrot.slane %v806, 4
        %v810 = vsel %vm498, %v807, %v808
        %vm811 = vcmask 736256
        %v812 = vsel %vm811, %v802, %v810
        %v813 = vsel %vm498, %v808, %v809
        %v814 = vsel %vm811, %v804, %v813
        %817 = vst [vmem:[#allocation3 + $0x40] sm:$0x33] %v812
        %818 = vst [vmem:[#allocation3 + $0x48] sm:$0x33] %v814
        %v819 = vld [vmem:[%s1] sm:$0xf]
        %v820 = vld [vmem:[#allocation3] sm:$0xff]
        %v821 = vld [vmem:[#allocation3 + $0x8] sm:$0xff]
        %v822 = vld [vmem:[#allocation3 + $0x10] sm:$0xff]
        %v823 = vld [vmem:[#allocation3 + $0x18] sm:$0xff]
        %v824 = vld [vmem:[#allocation3 + $0x20] sm:$0xff]
        %v825 = vld [vmem:[#allocation3 + $0x28] sm:$0xff]
        %v826 = vld [vmem:[#allocation3 + $0x30] sm:$0xff]
        %v827 = vld [vmem:[#allocation3 + $0x38] sm:$0xff]
        %v828 = vld [vmem:[#allocation3 + $0x40] sm:$0x33]
        %v829 = vld [vmem:[#allocation3 + $0x48] sm:$0x33]
        %v840 = vunpack.c.l.b16 %v820
        %v841 = vunpack.c.h.b16 %v820
        %v842 = vunpack.c.l.b16 %v821
        %v843 = vunpack.c.h.b16 %v821
        %v844 = vunpack.c.l.b16 %v822
        %v845 = vunpack.c.h.b16 %v822
        %v846 = vunpack.c.l.b16 %v823
        %v847 = vunpack.c.h.b16 %v823
        %v848 = vunpack.c.l.b16 %v824
        %v849 = vunpack.c.h.b16 %v824
        %v850 = vunpack.c.l.b16 %v825
        %v851 = vunpack.c.h.b16 %v825
        %v852 = vunpack.c.l.b16 %v826
        %v853 = vunpack.c.h.b16 %v826
        %v854 = vunpack.c.l.b16 %v827
        %v855 = vunpack.c.h.b16 %v827
        %v856 = vunpack.c.l.b16 %v828
        %v857 = vunpack.c.h.b16 %v828
        %v858 = vunpack.c.l.b16 %v829
        %v859 = vunpack.c.h.b16 %v829
        %v860 = vpack.c.b16 %v844, %v840
        %v861 = vpack.c.b16 %v845, %v841
        %v862 = vpack.c.b16 %v846, %v842
        %v863 = vpack.c.b16 %v847, %v843
        %v864 = vpack.c.b16 %v852, %v848
        %v865 = vpack.c.b16 %v853, %v849
        %v866 = vpack.c.b16 %v854, %v850
        %v867 = vpack.c.b16 %v855, %v851
        %v868 = vpack.c.b16 %v856, %v856
        %v869 = vpack.c.b16 %v857, %v857
        %v870 = vpack.c.b16 %v858, %v858
        %v871 = vpack.c.b16 %v859, %v859
        %vm880 = vcmask 293888
        %v882 = vsel %vm880, %v819, 0
        %vm884 = vcmask 1041408
        %v886 = vsel %vm884, %v868, 0
        %v889 = vsel %vm884, %v869, 0
        %v892 = vsel %vm884, %v870, 0
        %v895 = vsel %vm884, %v871, 0
        %897 = vmatprep.subr.bf16.mxu0 %v861
        %898 = vmatpush1.bf16.msra.mxu0 %v860
        %899 = vmatprep.subr.bf16.mxu0 %v865
        %900 = vmatpush1.bf16.msra.mxu0 %v864
        %901 = vmatprep.subr.bf16.mxu0 %v889
        %902 = vmatpush1.bf16.msra.mxu0 %v886
        %903 = vmatprep.subr.bf16.mxu0 0
        %904 = vmatpush1.bf16.msra.mxu0 0
        %905 = vmatprep.subr.bf16.mxu0 0
        %906 = vmatpush1.bf16.msra.mxu0 0
        %907 = vmatprep.subr.bf16.mxu0 0
        %908 = vmatpush1.bf16.msra.mxu0 0
        %909 = vmatprep.subr.bf16.mxu0 0
        %910 = vmatpush1.bf16.msra.mxu0 0
        %911 = vmatprep.subr.bf16.mxu0 0
        %912 = vmatpush1.bf16.msra.mxu0 0
        %913 = vmatprep.subr.bf16.mxu0 0
        %914 = vmatpush1.bf16.msra.mxu0 0
        %915 = vmatprep.subr.bf16.mxu0 0
        %916 = vmatpush1.bf16.msra.mxu0 0
        %917 = vmatprep.subr.bf16.mxu0 0
        %918 = vmatpush1.bf16.msra.mxu0 0
        %919 = vmatprep.subr.bf16.mxu0 0
        %920 = vmatpush1.bf16.msra.mxu0 0
        %921 = vmatprep.subr.bf16.mxu0 0
        %922 = vmatpush1.bf16.msra.mxu0 0
        %923 = vmatprep.subr.bf16.mxu0 0
        %924 = vmatpush1.bf16.msra.mxu0 0
        %925 = vmatprep.subr.bf16.mxu0 0
        %926 = vmatpush1.bf16.msra.mxu0 0
        %927 = vmatprep.subr.bf16.mxu0 0
        %928 = vmatpush1.bf16.msra.mxu0 0
        %929 = vmatprep.mubr.bf16.mxu0 0
        %930 = vmatmul.mubr.bf16.gmra.mrb[0].mxu0 %v882
        %v931 = vpop.f32.mrb[0].mxu0
        %v932 = vadd.f32 0.0, %v931
        %v933 = vpop.f32.mrb[0].mxu0
        %v934 = vadd.f32 0.0, %v933
        %v935 = vpop.f32.mrb[0].mxu0
        %v936 = vpop.f32.mrb[0].mxu0
        %937 = vdwg.mxu0
        %938 = vmatprep.subr.bf16.mxu0 %v863
        %939 = vmatpush1.bf16.msra.mxu0 %v862
        %940 = vmatprep.subr.bf16.mxu0 %v867
        %941 = vmatpush1.bf16.msra.mxu0 %v866
        %942 = vmatprep.subr.bf16.mxu0 %v895
        %943 = vmatpush1.bf16.msra.mxu0 %v892
        %944 = vmatprep.subr.bf16.mxu0 0
        %945 = vmatpush1.bf16.msra.mxu0 0
        %946 = vmatprep.subr.bf16.mxu0 0
        %947 = vmatpush1.bf16.msra.mxu0 0
        %948 = vmatprep.subr.bf16.mxu0 0
        %949 = vmatpush1.bf16.msra.mxu0 0
        %950 = vmatprep.subr.bf16.mxu0 0
        %951 = vmatpush1.bf16.msra.mxu0 0
        %952 = vmatprep.subr.bf16.mxu0 0
        %953 = vmatpush1.bf16.msra.mxu0 0
        %954 = vmatprep.subr.bf16.mxu0 0
        %955 = vmatpush1.bf16.msra.mxu0 0
        %956 = vmatprep.subr.bf16.mxu0 0
        %957 = vmatpush1.bf16.msra.mxu0 0
        %958 = vmatprep.subr.bf16.mxu0 0
        %959 = vmatpush1.bf16.msra.mxu0 0
        %960 = vmatprep.subr.bf16.mxu0 0
        %961 = vmatpush1.bf16.msra.mxu0 0
        %962 = vmatprep.subr.bf16.mxu0 0
        %963 = vmatpush1.bf16.msra.mxu0 0
        %964 = vmatprep.subr.bf16.mxu0 0
        %965 = vmatpush1.bf16.msra.mxu0 0
        %966 = vmatprep.subr.bf16.mxu0 0
        %967 = vmatpush1.bf16.msra.mxu0 0
        %968 = vmatprep.subr.bf16.mxu0 0
        %969 = vmatpush1.bf16.msra.mxu0 0
        %970 = vmatprep.mubr.bf16.mxu0 0
        %971 = vmatmul.mubr.bf16.gmra.mrb[0].mxu0 %v882
        %v972 = vpop.f32.mrb[0].mxu0
        %v973 = vadd.f32 0.0, %v972
        %v974 = vpop.f32.mrb[0].mxu0
        %v975 = vadd.f32 0.0, %v974
        %v976 = vpop.f32.mrb[0].mxu0
        %v977 = vpop.f32.mrb[0].mxu0
        %978 = vdwg.mxu0
        %v979 = vld [vmem:[%s2] sm:$0xff]
        %981 = vset.pattern.permute.xlu0 0
        %982 = vperm.xlu0 %981, %v979
        %v983 = vpop.permute.xlu0 %982
        %v985 = vmul.f32 %v932, %v983
        %v986 = vmul.f32 %v934, %v983
        %v987 = vmul.f32 %v973, %v983
        %v988 = vmul.f32 %v975, %v983
        %v989 = vld [vmem:[%s3] sm:$0xff]
        %991 = vset.pattern.permute.xlu0 0
        %992 = vperm.xlu0 %991, %v989
        %v993 = vpop.permute.xlu0 %992
        %v995 = vadd.f32 %v985, %v993
        %v996 = vadd.f32 %v986, %v993
        %v997 = vadd.f32 %v987, %v993
        %v998 = vadd.f32 %v988, %v993
        %v999 = vmax.f32 %v995, 0.0
        %v1000 = vmax.f32 %v996, 0.0
        %v1001 = vmax.f32 %v997, 0.0
        %v1002 = vmax.f32 %v998, 0.0
        %v1003 = vld [vmem:[%s7] sm:$0xf]
        %v1005 = vlaneseq
        %v1006 = vshrl.u32 %v1005, 7
        %v1007 = vsub.s32 0, %v1006
        %v1008 = vrot.slane %v1003, %v1007
        %v1009 = vlaneseq
        %v1010 = vshrl.u32 %v1009, 7
        %v1011 = vsub.s32 1, %v1010
        %v1012 = vrot.slane %v1003, %v1011
        %v1013 = vlaneseq
        %v1014 = vshrl.u32 %v1013, 7
        %v1015 = vsub.s32 2, %v1014
        %v1016 = vrot.slane %v1003, %v1015
        %v1017 = vlaneseq
        %v1018 = vshrl.u32 %v1017, 7
        %v1019 = vsub.s32 3, %v1018
        %v1020 = vrot.slane %v1003, %v1019
        %v1025 = vmul.f32 %v999, %v1008
        %v1026 = vmul.f32 %v1000, %v1012
        %v1027 = vmul.f32 %v1001, %v1016
        %v1028 = vmul.f32 %v1002, %v1020
        %v1029 = vpack.c.bf16 %v1025, %v1025
        %v1030 = vpack.c.bf16 %v1026, %v1026
        %v1031 = vpack.c.bf16 %v1027, %v1027
        %v1032 = vpack.c.bf16 %v1028, %v1028
        %v1037 = vunpack.c.l.b16 %v1029
        %v1038 = vunpack.c.l.b16 %v1030
        %v1039 = vunpack.c.l.b16 %v1031
        %v1040 = vunpack.c.l.b16 %v1032
        %v1041 = vpack.c.b16 %v1038, %v1037
        %v1042 = vpack.c.b16 %v1040, %v1039
        %1045 = vst [vmem:[#allocation4] sm:$0xff] %v1041
        %1046 = vst [vmem:[#allocation4 + $0x8] sm:$0xff] %v1042
        %v1047 = vld [vmem:[#allocation4] sm:$0xff]
        %v1048 = vld [vmem:[#allocation4 + $0x8] sm:$0xf]
        %1049 = vst [vmem:[#allocation5] sm:$0xff] %v1047
        %1050 = vst [vmem:[#allocation5 + $0x8] sm:$0xf] %v1048
        %v1051 = vld [vmem:[#allocation4] sm:$0xff]
        %v1052 = vld [vmem:[#allocation4 + $0x8] sm:$0xff]
        %1055 = vrot.lane.b32.xlu0 %v1051, 127
        %v1056 = vpop.permute.xlu0 %1055
        %1057 = vrot.lane.b32.xlu0 %v1052, 127
        %v1058 = vpop.permute.xlu0 %1057
        %v1059 = vrot.slane %v1056, 4
        %v1060 = vrot.slane %v1058, 4
        %v1061 = vsel %vm498, %v1059, %v1060
        %v1062 = vsel %vm500, %v1056, %v1061
        %v1063 = vsel %vm500, %v1058, %v1060
        %1066 = vst [vmem:[#allocation5 + $0xc] sm:$0xff] %v1062
        %1067 = vst [vmem:[#allocation5 + $0x14] sm:$0xf] %v1063
        %v1068 = vld [vmem:[#allocation4] sm:$0xff]
        %v1069 = vld [vmem:[#allocation4 + $0x8] sm:$0xff]
        %1072 = vrot.lane.b32.xlu0 %v1068, 126
        %v1073 = vpop.permute.xlu0 %1072
        %1074 = vrot.lane.b32.xlu0 %v1069, 126
        %v1075 = vpop.permute.xlu0 %1074
        %v1076 = vrot.slane %v1073, 4
        %v1077 = vrot.slane %v1075, 4
        %v1078 = vsel %vm498, %v1076, %v1077
        %v1079 = vsel %vm544, %v1073, %v1078
        %v1080 = vsel %vm544, %v1075, %v1077
        %1083 = vst [vmem:[#allocation5 + $0x18] sm:$0xff] %v1079
        %1084 = vst [vmem:[#allocation5 + $0x20] sm:$0xf] %v1080
        %v1085 = vld [vmem:[#allocation4] sm:$0xff]
        %v1086 = vld [vmem:[#allocation4 + $0x8] sm:$0xff]
        %1089 = vrot.lane.b32.xlu0 %v1085, 110
        %v1090 = vpop.permute.xlu0 %1089
        %1091 = vrot.lane.b32.xlu0 %v1086, 110
        %v1092 = vpop.permute.xlu0 %1091
        %v1093 = vrot.slane %v1090, 4
        %v1094 = vrot.slane %v1092, 4
        %v1095 = vsel %vm498, %v1093, %v1094
        %v1096 = vsel %vm589, %v1090, %v1095
        %v1097 = vsel %vm589, %v1092, %v1094
        %1100 = vst [vmem:[#allocation5 + $0x24] sm:$0xff] %v1096
        %1101 = vst [vmem:[#allocation5 + $0x2c] sm:$0xf] %v1097
        %v1102 = vld [vmem:[#allocation4] sm:$0xff]
        %v1103 = vld [vmem:[#allocation4 + $0x8] sm:$0xff]
        %1106 = vrot.lane.b32.xlu0 %v1102, 109
        %v1107 = vpop.permute.xlu0 %1106
        %1108 = vrot.lane.b32.xlu0 %v1103, 109
        %v1109 = vpop.permute.xlu0 %1108
        %v1110 = vrot.slane %v1107, 4
        %v1111 = vrot.slane %v1109, 4
        %v1112 = vsel %vm498, %v1110, %v1111
        %v1113 = vsel %vm633, %v1107, %v1112
        %v1114 = vsel %vm633, %v1109, %v1111
        %1117 = vst [vmem:[#allocation5 + $0x30] sm:$0xff] %v1113
        %1118 = vst [vmem:[#allocation5 + $0x38] sm:$0xf] %v1114
        %v1119 = vld [vmem:[#allocation4] sm:$0xff]
        %v1120 = vld [vmem:[#allocation4 + $0x8] sm:$0xff]
        %1123 = vrot.lane.b32.xlu0 %v1119, 108
        %v1124 = vpop.permute.xlu0 %1123
        %1125 = vrot.lane.b32.xlu0 %v1120, 108
        %v1126 = vpop.permute.xlu0 %1125
        %v1127 = vrot.slane %v1124, 4
        %v1128 = vrot.slane %v1126, 4
        %v1129 = vsel %vm498, %v1127, %v1128
        %v1130 = vsel %vm678, %v1124, %v1129
        %v1131 = vsel %vm678, %v1126, %v1128
        %1134 = vst [vmem:[#allocation5 + $0x3c] sm:$0xff] %v1130
        %1135 = vst [vmem:[#allocation5 + $0x44] sm:$0xf] %v1131
        %v1136 = vld [vmem:[#allocation4] sm:$0xff]
        %v1137 = vld [vmem:[#allocation4 + $0x8] sm:$0xff]
        %1140 = vrot.lane.b32.xlu0 %v1136, 92
        %v1141 = vpop.permute.xlu0 %1140
        %1142 = vrot.lane.b32.xlu0 %v1137, 92
        %v1143 = vpop.permute.xlu0 %1142
        %v1144 = vrot.slane %v1141, 4
        %v1145 = vrot.slane %v1143, 4
        %v1146 = vsel %vm498, %v1144, %v1145
        %v1147 = vsel %vm722, %v1141, %v1146
        %v1148 = vsel %vm722, %v1143, %v1145
        %1151 = vst [vmem:[#allocation5 + $0x48] sm:$0xff] %v1147
        %1152 = vst [vmem:[#allocation5 + $0x50] sm:$0xf] %v1148
        %v1153 = vld [vmem:[#allocation4] sm:$0xff]
        %v1154 = vld [vmem:[#allocation4 + $0x8] sm:$0xff]
        %1157 = vrot.lane.b32.xlu0 %v1153, 91
        %v1158 = vpop.permute.xlu0 %1157
        %1159 = vrot.lane.b32.xlu0 %v1154, 91
        %v1160 = vpop.permute.xlu0 %1159
        %v1161 = vrot.slane %v1158, 4
        %v1162 = vrot.slane %v1160, 4
        %v1163 = vsel %vm498, %v1161, %v1162
        %v1164 = vsel %vm767, %v1158, %v1163
        %v1165 = vsel %vm767, %v1160, %v1162
        %1168 = vst [vmem:[#allocation5 + $0x54] sm:$0xff] %v1164
        %1169 = vst [vmem:[#allocation5 + $0x5c] sm:$0xf] %v1165
        %v1170 = vld [vmem:[#allocation4] sm:$0xff]
        %v1171 = vld [vmem:[#allocation4 + $0x8] sm:$0xff]
        %1174 = vrot.lane.b32.xlu0 %v1170, 90
        %v1175 = vpop.permute.xlu0 %1174
        %1176 = vrot.lane.b32.xlu0 %v1171, 90
        %v1177 = vpop.permute.xlu0 %1176
        %v1178 = vrot.slane %v1175, 4
        %v1179 = vrot.slane %v1177, 4
        %v1180 = vsel %vm498, %v1178, %v1179
        %v1181 = vsel %vm811, %v1175, %v1180
        %v1182 = vsel %vm811, %v1177, %v1179
        %1185 = vst [vmem:[#allocation5 + $0x60] sm:$0xff] %v1181
        %1186 = vst [vmem:[#allocation5 + $0x68] sm:$0xf] %v1182
        %v1187 = vld [vmem:[#allocation2] sm:$0xff]
        %v1189 = vcombine.high %v1187, %v1187
        %v1191 = vunpack.c.l.s4 1983009808
        %v1192 = vunpack.c.0.s8 %v1191
        %v1193 = vlaneseq
        %v1194 = vshrl.u32 %v1193, 7
        %v1195 = vsub.s32 %v1192, %v1194
        %v1196 = vrot.slane %v1187, %v1195
        %v1198 = vunpack.c.l.s4 1983009808
        %v1199 = vunpack.c.0.s8 %v1198
        %v1200 = vlaneseq
        %v1201 = vshrl.u32 %v1200, 7
        %v1202 = vsub.s32 %v1199, %v1201
        %v1203 = vrot.slane %v1189, %v1202
        %1204 = vrot.lane.b32.xlu0 %v1196, 90
        %v1205 = vpop.permute.xlu0 %1204
        %1206 = vrot.lane.b32.xlu0 %v1203, 90
        %v1207 = vpop.permute.xlu0 %1206
        %v1208 = vrot.slane %v1205, 4
        %v1209 = vrot.slane %v1207, 4
        %v1210 = vsel %vm498, %v1208, %v1209
        %v1211 = vsel %vm811, %v1205, %v1210
        %v1212 = vsel %vm811, %v1207, %v1209
        %1215 = vst [vmem:[#allocation5 + $0x6c] sm:$0x33] %v1211
        %1216 = vst [vmem:[#allocation5 + $0x74] sm:$0x3] %v1212
        %v1217 = vld [vmem:[%s4] sm:$0xf]
        %v1218 = vld [vmem:[%s4 + $0x4] sm:$0xf]
        %v1219 = vld [vmem:[#allocation5] sm:$0xff]
        %v1220 = vld [vmem:[#allocation5 + $0x8] sm:$0xf]
        %v1221 = vld [vmem:[#allocation5 + $0xc] sm:$0xff]
        %v1222 = vld [vmem:[#allocation5 + $0x14] sm:$0xf]
        %v1223 = vld [vmem:[#allocation5 + $0x18] sm:$0xff]
        %v1224 = vld [vmem:[#allocation5 + $0x20] sm:$0xf]
        %v1225 = vld [vmem:[#allocation5 + $0x24] sm:$0xff]
        %v1226 = vld [vmem:[#allocation5 + $0x2c] sm:$0xf]
        %v1227 = vld [vmem:[#allocation5 + $0x30] sm:$0xff]
        %v1228 = vld [vmem:[#allocation5 + $0x38] sm:$0xf]
        %v1229 = vld [vmem:[#allocation5 + $0x3c] sm:$0xff]
        %v1230 = vld [vmem:[#allocation5 + $0x44] sm:$0xf]
        %v1231 = vld [vmem:[#allocation5 + $0x48] sm:$0xff]
        %v1232 = vld [vmem:[#allocation5 + $0x50] sm:$0xf]
        %v1233 = vld [vmem:[#allocation5 + $0x54] sm:$0xff]
        %v1234 = vld [vmem:[#allocation5 + $0x5c] sm:$0xf]
        %v1235 = vld [vmem:[#allocation5 + $0x60] sm:$0xff]
        %v1236 = vld [vmem:[#allocation5 + $0x68] sm:$0xf]
        %v1237 = vld [vmem:[#allocation5 + $0x6c] sm:$0x33]
        %v1238 = vld [vmem:[#allocation5 + $0x74] sm:$0x3]
        %v1241 = vunpack.c.l.b16 %v1217
        %v1242 = vunpack.c.l.b16 %v1218
        %v1243 = vpack.c.b16 %v1242, %v1241
        %v1264 = vunpack.c.l.b16 %v1219
        %v1265 = vunpack.c.h.b16 %v1219
        %v1266 = vunpack.c.l.b16 %v1220
        %v1267 = vunpack.c.l.b16 %v1221
        %v1268 = vunpack.c.h.b16 %v1221
        %v1269 = vunpack.c.l.b16 %v1222
        %v1270 = vunpack.c.l.b16 %v1223
        %v1271 = vunpack.c.h.b16 %v1223
        %v1272 = vunpack.c.l.b16 %v1224
        %v1273 = vunpack.c.l.b16 %v1225
        %v1274 = vunpack.c.h.b16 %v1225
        %v1275 = vunpack.c.l.b16 %v1226
        %v1276 = vunpack.c.l.b16 %v1227
        %v1277 = vunpack.c.h.b16 %v1227
        %v1278 = vunpack.c.l.b16 %v1228
        %v1279 = vunpack.c.l.b16 %v1229
        %v1280 = vunpack.c.h.b16 %v1229
        %v1281 = vunpack.c.l.b16 %v1230
        %v1282 = vunpack.c.l.b16 %v1231
        %v1283 = vunpack.c.h.b16 %v1231
        %v1284 = vunpack.c.l.b16 %v1232
        %v1285 = vunpack.c.l.b16 %v1233
        %v1286 = vunpack.c.h.b16 %v1233
        %v1287 = vunpack.c.l.b16 %v1234
        %v1288 = vunpack.c.l.b16 %v1235
        %v1289 = vunpack.c.h.b16 %v1235
        %v1290 = vunpack.c.l.b16 %v1236
        %v1291 = vunpack.c.l.b16 %v1237
        %v1292 = vunpack.c.h.b16 %v1237
        %v1293 = vunpack.c.l.b16 %v1238
        %v1294 = vpack.c.b16 %v1267, %v1264
        %v1295 = vpack.c.b16 %v1268, %v1265
        %v1296 = vpack.c.b16 %v1269, %v1266
        %v1297 = vpack.c.b16 %v1273, %v1270
        %v1298 = vpack.c.b16 %v1274, %v1271
        %v1299 = vpack.c.b16 %v1275, %v1272
        %v1300 = vpack.c.b16 %v1279, %v1276
        %v1301 = vpack.c.b16 %v1280, %v1277
        %v1302 = vpack.c.b16 %v1281, %v1278
        %v1303 = vpack.c.b16 %v1285, %v1282
        %v1304 = vpack.c.b16 %v1286, %v1283
        %v1305 = vpack.c.b16 %v1287, %v1284
        %v1306 = vpack.c.b16 %v1291, %v1288
        %v1307 = vpack.c.b16 %v1292, %v1289
        %v1308 = vpack.c.b16 %v1293, %v1290
        %vm1321 = vcmask 621568
        %v1323 = vsel %vm1321, %v1243, 0
        %vm1325 = vcmask 1045504
        %v1327 = vsel %vm1325, %v1306, 0
        %v1330 = vsel %vm1325, %v1307, 0
        %v1333 = vsel %vm1325, %v1308, 0
        %1335 = vmatprep.subr.bf16.mxu0 %v1295
        %1336 = vmatpush1.bf16.msra.mxu0 %v1294
        %1337 = vmatprep.subr.bf16.mxu0 %v1298
        %1338 = vmatpush1.bf16.msra.mxu0 %v1297
        %1339 = vmatprep.subr.bf16.mxu0 %v1301
        %1340 = vmatpush1.bf16.msra.mxu0 %v1300
        %1341 = vmatprep.subr.bf16.mxu0 %v1304
        %1342 = vmatpush1.bf16.msra.mxu0 %v1303
        %1343 = vmatprep.subr.bf16.mxu0 %v1330
        %1344 = vmatpush1.bf16.msra.mxu0 %v1327
        %1345 = vmatprep.subr.bf16.mxu0 0
        %1346 = vmatpush1.bf16.msra.mxu0 0
        %1347 = vmatprep.subr.bf16.mxu0 0
        %1348 = vmatpush1.bf16.msra.mxu0 0
        %1349 = vmatprep.subr.bf16.mxu0 0
        %1350 = vmatpush1.bf16.msra.mxu0 0
        %1351 = vmatprep.subr.bf16.mxu0 0
        %1352 = vmatpush1.bf16.msra.mxu0 0
        %1353 = vmatprep.subr.bf16.mxu0 0
        %1354 = vmatpush1.bf16.msra.mxu0 0
        %1355 = vmatprep.subr.bf16.mxu0 0
        %1356 = vmatpush1.bf16.msra.mxu0 0
        %1357 = vmatprep.subr.bf16.mxu0 0
        %1358 = vmatpush1.bf16.msra.mxu0 0
        %1359 = vmatprep.subr.bf16.mxu0 0
        %1360 = vmatpush1.bf16.msra.mxu0 0
        %1361 = vmatprep.subr.bf16.mxu0 0
        %1362 = vmatpush1.bf16.msra.mxu0 0
        %1363 = vmatprep.subr.bf16.mxu0 0
        %1364 = vmatpush1.bf16.msra.mxu0 0
        %1365 = vmatprep.subr.bf16.mxu0 0
        %1366 = vmatpush1.bf16.msra.mxu0 0
        %1367 = vmatprep.mubr.bf16.mxu0 0
        %1368 = vmatmul.mubr.bf16.gmra.mrb[0].mxu0 %v1323
        %v1369 = vpop.f32.mrb[0].mxu0
        %v1370 = vadd.f32 0.0, %v1369
        %v1371 = vpop.f32.mrb[0].mxu0
        %v1372 = vadd.f32 0.0, %v1371
        %v1373 = vpop.f32.mrb[0].mxu0
        %v1374 = vadd.f32 0.0, %v1373
        %v1375 = vpop.f32.mrb[0].mxu0
        %v1376 = vadd.f32 0.0, %v1375
        %1377 = vdwg.mxu0
        %1378 = vmatprep.subr.bf16.mxu0 0
        %1379 = vmatpush1.bf16.msra.mxu0 %v1296
        %1380 = vmatprep.subr.bf16.mxu0 0
        %1381 = vmatpush1.bf16.msra.mxu0 %v1299
        %1382 = vmatprep.subr.bf16.mxu0 0
        %1383 = vmatpush1.bf16.msra.mxu0 %v1302
        %1384 = vmatprep.subr.bf16.mxu0 0
        %1385 = vmatpush1.bf16.msra.mxu0 %v1305
        %1386 = vmatprep.subr.bf16.mxu0 0
        %1387 = vmatpush1.bf16.msra.mxu0 %v1333
        %1388 = vmatprep.subr.bf16.mxu0 0
        %1389 = vmatpush1.bf16.msra.mxu0 0
        %1390 = vmatprep.subr.bf16.mxu0 0
        %1391 = vmatpush1.bf16.msra.mxu0 0
        %1392 = vmatprep.subr.bf16.mxu0 0
        %1393 = vmatpush1.bf16.msra.mxu0 0
        %1394 = vmatprep.subr.bf16.mxu0 0
        %1395 = vmatpush1.bf16.msra.mxu0 0
        %1396 = vmatprep.subr.bf16.mxu0 0
        %1397 = vmatpush1.bf16.msra.mxu0 0
        %1398 = vmatprep.subr.bf16.mxu0 0
        %1399 = vmatpush1.bf16.msra.mxu0 0
        %1400 = vmatprep.subr.bf16.mxu0 0
        %1401 = vmatpush1.bf16.msra.mxu0 0
        %1402 = vmatprep.subr.bf16.mxu0 0
        %1403 = vmatpush1.bf16.msra.mxu0 0
        %1404 = vmatprep.subr.bf16.mxu0 0
        %1405 = vmatpush1.bf16.msra.mxu0 0
        %1406 = vmatprep.subr.bf16.mxu0 0
        %1407 = vmatpush1.bf16.msra.mxu0 0
        %1408 = vmatprep.subr.bf16.mxu0 0
        %1409 = vmatpush1.bf16.msra.mxu0 0
        %1410 = vmatprep.mubr.bf16.mxu0 0
        %1411 = vmatmul.mubr.bf16.gmra.mrb[0].mxu0 %v1323
        %v1412 = vpop.f32.mrb[0].mxu0
        %v1413 = vadd.f32 0.0, %v1412
        %v1414 = vpop.f32.mrb[0].mxu0
        %v1415 = vpop.f32.mrb[0].mxu0
        %v1416 = vadd.f32 0.0, %v1415
        %v1417 = vpop.f32.mrb[0].mxu0
        %1418 = vdwg.mxu0
        %v1419 = vld [vmem:[%s5] sm:$0xff]
        %1421 = vset.pattern.permute.xlu0 0
        %1422 = vperm.xlu0 %1421, %v1419
        %v1423 = vpop.permute.xlu0 %1422
        %v1425 = vmul.f32 %v1370, %v1423
        %v1426 = vmul.f32 %v1372, %v1423
        %v1427 = vmul.f32 %v1413, %v1423
        %v1428 = vld [vmem:[%s6] sm:$0xff]
        %1430 = vset.pattern.permute.xlu0 0
        %1431 = vperm.xlu0 %1430, %v1428
        %v1432 = vpop.permute.xlu0 %1431
        %v1434 = vadd.f32 %v1425, %v1432
        %v1435 = vadd.f32 %v1426, %v1432
        %v1436 = vadd.f32 %v1427, %v1432
        %v1437 = vmax.f32 %v1434, 0.0
        %v1438 = vmax.f32 %v1435, 0.0
        %v1439 = vmax.f32 %v1436, 0.0
        %v1440 = vld [vmem:[%s8] sm:$0xff]
        %1442 = vset.pattern.permute.xlu0 0
        %1443 = vperm.xlu0 %1442, %v1440
        %v1444 = vpop.permute.xlu0 %1443
        %v1446 = vadd.f32 %v1374, %v1444
        %v1447 = vadd.f32 %v1376, %v1444
        %v1448 = vadd.f32 %v1416, %v1444
        %v1449 = vadd.f32 %v1437, %v1446
        %v1450 = vadd.f32 %v1438, %v1447
        %v1451 = vadd.f32 %v1439, %v1448
        %1452 = vst [vmem:[%s325] sm:$0xff] %v1449
        %1453 = vst [vmem:[%s325 + $0x8] sm:$0xff] %v1450
        %1454 = vst [vmem:[%s325 + $0x10] sm:$0xff] %v1451
        %s1455 = sand.u32 %s225, 1
        %s1456 = scalar_lea.sflag [#allocation7], %s1455
        %s1457 = sand.u32 %s225, 1
        %s1458 = smul.addr %s1457, 24
        %s1459 = scalar_lea.vmem [#allocation6], %s1458
        // Predicated region
        $region57: #{tpu_custom_call.1} parent=55 // pred_check
          %p1460 = pneg %p235
        $region58: #{tpu_custom_call.1} parent=55 // pred_check_branch
          %1462 = sbr.rel (%p1460) target = $region60
        $region59: #{tpu_custom_call.1} parent=55 // pred_region
          %s1464 = ssub.s32 384, 384
          %1465 = vsyncadd %s1456, %s1464
          %s1466 = smul.addr %s23, 3
          %s1467 = smul.addr %s1466, 128
          %s1468 = scalar_lea.hbm %s9, %s1467
          %s1470 = sshll.u32 %s1459, 4
          %s1471 = int_to_ptr.vmem [resolvable:$true] %s1470
          %1473 = dma.vmem_to_hbm [thread:$0]  %s1471, 384, %s1468, %s1456
        $region60: #{tpu_custom_call.1} parent=55 // pred_fallthru
          _
      $region56: #{tpu_custom_call.1} parent=5 // pred_fallthru
        _
      %p1474 = scmp.le.s32.totalorder 2, %s18
      // Predicated region
      $region61: #{tpu_custom_call.1} parent=5 // pred_check
        %p1475 = pneg %p1474
      $region62: #{tpu_custom_call.1} parent=5 // pred_check_branch
        %1477 = sbr.rel (%p1475) target = $region64
      $region63: #{tpu_custom_call.1} parent=5 // pred_region
        %s1478 = ssub.s32 %s18, 2
        // Predicated region
        $region65: #{tpu_custom_call.1} parent=63 // pred_check
          %p1479 = pneg %p241
        $region66: #{tpu_custom_call.1} parent=63 // pred_check_branch
          %1481 = sbr.rel (%p1479) target = $region68
        $region67: #{tpu_custom_call.1} parent=63 // pred_region
          %s1482 = sand.u32 %s226, 1
          %s1483 = scalar_lea.sflag [#allocation7], %s1482
          %s1484 = sand.u32 %s226, 1
          %s1485 = smul.addr %s1484, 24
          %s1486 = scalar_lea.vmem [#allocation6], %s1485
          %1487 = dma.done %s1483, 384
        $region68: #{tpu_custom_call.1} parent=63 // pred_fallthru
          _
      $region64: #{tpu_custom_call.1} parent=5 // pred_fallthru
        _
    $region6: #{tpu_custom_call.1} parent=1 // loop_footer
      %s22 = sadd.s32 1, %s18
    $region7: #{tpu_custom_call.1} parent=1 // loop_footer_branch
      %17 = sbr.rel target = $region3
    $region8: #{tpu_custom_call.1} parent=1 // loop_exit
      _
    %1488 = vsyncpa [#allocation7], 1
    %s1489 = scalar_lea.sflag [#allocation7], 1
    %1490 = vsyncpa %s1489, 1

</llo_original>
